<compile_context>
chip_gen: v7x
topology: tpu7x:2x2x1
jax: 0.10.0
libtpu: 0.0.40
codegen_flags: <defaults>
</compile_context>

<pallas_src>
import math

import jax
import jax.numpy as jnp
from jax import lax
from jax.experimental import pallas as pl
from jax.experimental.pallas import tpu as pltpu


# ---------------------------------------------------------------------------
# model dimensions (small, synthetic)
# ---------------------------------------------------------------------------
B = 2          # batch
S = 8          # sequence length
H = 32         # hidden size
F = 64         # FFN inner size
V = 50         # vocab size
T = 4          # num_generated_triples (decoder slots)
NUM_CLASSES = 4
C = NUM_CLASSES + 1            # relation logits incl. "no relation"
LANE = 128

SCALE = 1.0 / math.sqrt(H)
NEG_INF = -1e9
MASK_FILL = -10000.0

# -- 128-aligned column offsets inside the packed (H, WBIG_COLS) weight slab --
C_EQKV = 0        # encoder q|k|v            (3H, pad -> 128)
C_EWO = 128       # encoder attn out          (H, pad -> 128)
C_EFF1 = 256      # encoder FFN in            (F, pad -> 128)
C_DSQKV = 384     # decoder self q|k|v       (3H, pad -> 128)
C_DSWO = 512      # decoder self out          (H, pad -> 128)
C_DCWQ = 640      # decoder cross q           (H, pad -> 128)
C_DCWO = 768      # decoder cross out         (H, pad -> 128)
C_DFF1 = 896      # decoder FFN in            (F, pad -> 128)
C_ENCG = 1024     # "enc" group (256): [0:2H) cross k|v (pad->128), [128:256) 4x pointer W2
C_HDG = 1280      # "hd"  group (256): [0:128) 4x pointer W1, [128:128+C) classifier
WBIG_COLS = 1536

# -- row indices inside the packed (16, 128) bias / LayerNorm table ----------
(R_EB1, R_EB2, R_DB1, R_DB2,
 R_ELN0G, R_ELN0B, R_ELN1G, R_ELN1B,
 R_DLN0G, R_DLN0B, R_DLN1G, R_DLN1B, R_DLN2G, R_DLN2B,
 R_BC, R_PB) = range(16)
N_VEC_ROWS = 16


def _layer_norm(x, g, b, eps=1e-12):
    mu = jnp.mean(x, axis=-1, keepdims=True)
    var = jnp.mean((x - mu) ** 2, axis=-1, keepdims=True)
    return (x - mu) * lax.rsqrt(var + eps) * g + b


# ---------------------------------------------------------------------------
# fused kernel: encoder block + decoder layer + classifier + pointer heads
# ---------------------------------------------------------------------------
def smarte_kernel(x_ref, mkey_ref, mrow_ref, qemb_ref,
                  wbig_ref, wffn2_ref, wpv_ref, vecs_ref,
                  ptr_out_ref, cls_out_ref):
    f32, bf16 = jnp.float32, jnp.bfloat16

    def vrow(r, w):                                 # (1, w) bias / LN row
        return vecs_ref[r:r + 1, 0:w]

    def proj(v, col, w):                            # bf16 MXU matmul, f32 acc
        return jnp.dot(v.astype(bf16), wbig_ref[:, col:col + w],
                       preferred_element_type=f32)

    def softmax(x):
        m = jnp.max(x, axis=-1, keepdims=True)
        e = jnp.exp(x - m)
        return e * pl.reciprocal(jnp.sum(e, axis=-1, keepdims=True), approx=True)

    keymask = mkey_ref[...] > 0.0                   # (B,1,S) bool, computed once

    # ---------------- encoder block (batched over B) --------------------------
    x = x_ref[...].reshape(B * S, H)                # (B*S, H) f32 embeddings
    qkv = proj(x, C_EQKV, 128).reshape(B, S, 128)   # q|k|v|pad in one MXU pass
    q3 = qkv[..., 0:H].astype(bf16)
    k3 = qkv[..., H:2 * H].astype(bf16)
    v3 = qkv[..., 2 * H:3 * H].astype(bf16)
    sc = jnp.einsum('bqh,bkh->bqk', q3, k3, preferred_element_type=f32) * SCALE
    sc = jnp.where(keymask, sc, NEG_INF)            # padded keys -> -1e9
    ctx = jnp.einsum('bqk,bkh->bqh', softmax(sc).astype(bf16), v3,
                     preferred_element_type=f32).reshape(B * S, H)
    h = _layer_norm(x + proj(ctx, C_EWO, 128)[:, 0:H],
                    vrow(R_ELN0G, H), vrow(R_ELN0B, H))
    ff = jax.nn.gelu(proj(h, C_EFF1, 128)[:, 0:F] + vrow(R_EB1, F))
    ff = jnp.dot(ff.astype(bf16), wffn2_ref[:, 0:128],
                 preferred_element_type=f32)[:, 0:H] + vrow(R_EB2, H)
    enc = _layer_norm(h + ff, vrow(R_ELN1G, H), vrow(R_ELN1B, H))   # (B*S, H)

    # ---------------- decoder: slot self-attention (batch-invariant) ----------
    hq = qemb_ref[...]                              # (T, H)
    qkvs = proj(hq, C_DSQKV, 128)
    qs = qkvs[:, 0:H].astype(bf16)
    ks = qkvs[:, H:2 * H].astype(bf16)
    vs = qkvs[:, 2 * H:3 * H].astype(bf16)
    ss = lax.dot_general(qs, ks, (((1,), (1,)), ((), ())),
                         preferred_element_type=f32) * SCALE        # (T, T)
    sa = jnp.dot(softmax(ss).astype(bf16), vs, preferred_element_type=f32)
    hq = _layer_norm(hq + proj(sa, C_DSWO, 128)[:, 0:H],
                     vrow(R_DLN0G, H), vrow(R_DLN0B, H))            # (T, H)

    # ---------------- decoder: masked cross-attention over encoder states -----
    qc3 = jnp.broadcast_to(proj(hq, C_DCWQ, 128)[:, 0:H].astype(bf16)[None],
                           (B, T, H))
    encp = proj(enc, C_ENCG, 256)                   # (B*S, 256): k|v|pad | 4xPW2
    kc3 = encp[:, 0:H].reshape(B, S, H).astype(bf16)
    vc3 = encp[:, H:2 * H].reshape(B, S, H).astype(bf16)
    e2 = encp[:, 128:256]                           # (B*S, 128) pointer W2 @ enc
    scc = jnp.einsum('bth,bsh->bts', qc3, kc3, preferred_element_type=f32) * SCALE
    scc = jnp.where(keymask, scc, NEG_INF)
    ca = jnp.einsum('bts,bsh->bth', softmax(scc).astype(bf16), vc3,
                    preferred_element_type=f32).reshape(B * T, H)
    hq_rep = jnp.broadcast_to(hq[None], (B, T, H)).reshape(B * T, H)
    hd = _layer_norm(hq_rep + proj(ca, C_DCWO, 128)[:, 0:H],
                     vrow(R_DLN1G, H), vrow(R_DLN1B, H))            # (B*T, H)

    # ---------------- decoder FFN ----------------------------------------------
    ff = jax.nn.gelu(proj(hd, C_DFF1, 128)[:, 0:F] + vrow(R_DB1, F))
    ff = jnp.dot(ff.astype(bf16), wffn2_ref[:, 128:256],
                 preferred_element_type=f32)[:, 0:H] + vrow(R_DB2, H)
    hd = _layer_norm(hd + ff, vrow(R_DLN2G, H), vrow(R_DLN2B, H))   # (B*T, H)

    # ---------------- heads: classifier + 4 pointer heads ----------------------
    hdp = proj(hd, C_HDG, 256)                      # (B*T, 256): 4xPW1 | WCLS
    cls_out_ref[...] = (hdp[:, 128:256] + vrow(R_BC, LANE)).reshape(B, T, LANE)

    h1 = hdp[:, 0:128]                              # (B*T, 128) pointer W1 @ hd
    pb = vrow(R_PB, LANE)                           # (1, 128) stacked pointer biases
    inter = jnp.tanh(h1.reshape(B, T, 1, LANE)
                     + e2.reshape(B, 1, S, LANE)
                     + pb.reshape(1, 1, 1, LANE))   # (B, T, S, 128), f32
    # one MXU matmul against the block-diagonal pv matrix: head i -> lane i
    ptr = jnp.dot(inter.reshape(B * T * S, LANE).astype(bf16), wpv_ref[...],
                  preferred_element_type=f32).reshape(B, T, S, LANE)
    # masked_fill((1 - attention_mask).bool(), -10000.0)
    ptr_out_ref[...] = jnp.where(mrow_ref[...] > 0.0, ptr, MASK_FILL)


# ---------------------------------------------------------------------------
# params + wrapper
# ---------------------------------------------------------------------------
def init_params(key):
    ks = iter(jax.random.split(key, 64))
    w = lambda *shape: 0.02 * jax.random.normal(next(ks), shape, jnp.float32)
    return {
        # embeddings
        "word_emb": w(V, H), "pos_emb": w(S, H),
        # encoder block
        "e_wq": w(H, H), "e_wk": w(H, H), "e_wv": w(H, H), "e_wo": w(H, H),
        "e_w1": w(H, F), "e_b1": jnp.zeros((F,), jnp.float32),
        "e_w2": w(F, H), "e_b2": jnp.zeros((H,), jnp.float32),
        "e_ln_g": jnp.ones((2, H), jnp.float32),
        "e_ln_b": jnp.zeros((2, H), jnp.float32),
        # decoder
        "query_emb": w(T, H),
        "d_wq_s": w(H, H), "d_wk_s": w(H, H), "d_wv_s": w(H, H), "d_wo_s": w(H, H),
        "d_wq_c": w(H, H), "d_wk_c": w(H, H), "d_wv_c": w(H, H), "d_wo_c": w(H, H),
        "d_w1": w(H, F), "d_b1": jnp.zeros((F,), jnp.float32),
        "d_w2": w(F, H), "d_b2": jnp.zeros((H,), jnp.float32),
        "d_ln_g": jnp.ones((3, H), jnp.float32),
        "d_ln_b": jnp.zeros((3, H), jnp.float32),
        "wc": w(H, C), "bc": jnp.zeros((C,), jnp.float32),
        # 4 pointer heads: [head_start, head_end, tail_start, tail_end]
        "pw1": w(4, H, H), "pw2": w(4, H, H),
        "pb": jnp.zeros((4, H), jnp.float32), "pv": w(4, H),
    }


def _pad_cols(w, width):
    return jnp.pad(w, ((0, 0), (0, width - w.shape[1])))


@jax.jit
def smarte_forward(params, input_ids, attention_mask):
    p = params

    # embedding lookup (plain JAX glue)
    x = p["word_emb"][input_ids] + p["pos_emb"][None, :, :]          # (B, S, H)
    maskf = attention_mask.astype(jnp.float32)
    mask_keys = maskf.reshape(B, 1, S)                               # attention mask
    mask_rows = jnp.broadcast_to(maskf.reshape(B, 1, S, 1), (B, T, S, 1))

    # ---- packed weight slab: every segment starts on a 128-lane boundary ----
    wbig = jnp.concatenate(
        [_pad_cols(jnp.concatenate([p["e_wq"], p["e_wk"], p["e_wv"]], axis=1), 128),
         _pad_cols(p["e_wo"], 128),
         _pad_cols(p["e_w1"], 128),
         _pad_cols(jnp.concatenate([p["d_wq_s"], p["d_wk_s"], p["d_wv_s"]], axis=1), 128),
         _pad_cols(p["d_wo_s"], 128),
         _pad_cols(p["d_wq_c"], 128),
         _pad_cols(p["d_wo_c"], 128),
         _pad_cols(p["d_w1"], 128),
         _pad_cols(jnp.concatenate([p["d_wk_c"], p["d_wv_c"]], axis=1), 128),  # enc grp blk0
         jnp.concatenate([p["pw2"][i] for i in range(4)], axis=1),             # enc grp blk1
         jnp.concatenate([p["pw1"][i] for i in range(4)], axis=1),             # hd  grp blk0
         _pad_cols(p["wc"], 128)],                                             # hd  grp blk1
        axis=1).astype(jnp.bfloat16)
    assert wbig.shape == (H, WBIG_COLS)

    wffn2 = jnp.concatenate([_pad_cols(p["e_w2"], 128), _pad_cols(p["d_w2"], 128)],
                            axis=1).astype(jnp.bfloat16)             # (F, 256)

    # block-diagonal pointer reduction matrix: pv_i in rows i*H..(i+1)*H, col i
    wpv = jnp.zeros((LANE, LANE), jnp.float32)
    for i in range(4):
        wpv = wpv.at[i * H:(i + 1) * H, i].set(p["pv"][i])
    wpv = wpv.astype(jnp.bfloat16)

    def row(v):
        v = v.reshape(-1)
        return jnp.pad(v, (0, LANE - v.shape[0]))[None, :]

    vecs = jnp.concatenate(
        [row(p["e_b1"]), row(p["e_b2"]), row(p["d_b1"]), row(p["d_b2"]),
         row(p["e_ln_g"][0]), row(p["e_ln_b"][0]),
         row(p["e_ln_g"][1]), row(p["e_ln_b"][1]),
         row(p["d_ln_g"][0]), row(p["d_ln_b"][0]),
         row(p["d_ln_g"][1]), row(p["d_ln_b"][1]),
         row(p["d_ln_g"][2]), row(p["d_ln_b"][2]),
         row(p["bc"]), row(p["pb"])],
        axis=0)                                                      # (16, 128)
    assert vecs.shape == (N_VEC_ROWS, LANE)

    vmem_spec = pl.BlockSpec(memory_space=pltpu.MemorySpace.VMEM)
    ptr_slab, cls_slab = pl.pallas_call(
        smarte_kernel,
        out_shape=(jax.ShapeDtypeStruct((B, T, S, LANE), jnp.float32),
                   jax.ShapeDtypeStruct((B, T, LANE), jnp.float32)),
        in_specs=[vmem_spec] * 8,
        out_specs=(vmem_spec, vmem_spec),
        compiler_params=pltpu.CompilerParams(vmem_limit_bytes=32 * 1024 * 1024),
    )(x, mask_keys, mask_rows, p["query_emb"], wbig, wffn2, wpv, vecs)

    # wrapper-side unpack (layout plumbing only)
    return {
        "pred_rel_logits": cls_slab[:, :, 0:C],                      # (B, T, C)
        "head_start_logits": ptr_slab[:, :, :, 0],                   # (B, T, S)
        "head_end_logits": ptr_slab[:, :, :, 1],
        "tail_start_logits": ptr_slab[:, :, :, 2],
        "tail_end_logits": ptr_slab[:, :, :, 3],
    }


if __name__ == "__main__":
    key = jax.random.PRNGKey(0)
    pkey, ikey = jax.random.split(key)
    params = init_params(pkey)

    input_ids = jax.random.randint(ikey, (B, S), 0, V, dtype=jnp.int32)
    attention_mask = jnp.ones((B, S), jnp.int32).at[1, 6:].set(0)  # pad last 2 of batch 1

    out = smarte_forward(params, input_ids, attention_mask)
    jax.block_until_ready(out)

    assert out["pred_rel_logits"].shape == (B, T, C)
    assert out["head_start_logits"].shape == (B, T, S)
    assert out["tail_end_logits"].shape == (B, T, S)
    # masked positions were filled with -10000.0
    assert bool(jnp.all(out["head_start_logits"][1, :, 6:] == MASK_FILL))
    assert bool(jnp.all(out["tail_end_logits"][1, :, 6:] == MASK_FILL))
    # kept positions are finite, non-filled values
    assert bool(jnp.all(jnp.isfinite(out["pred_rel_logits"])))
    assert bool(jnp.all(out["head_start_logits"][0] != MASK_FILL))
    print("KERNEL_OK")
</pallas_src>

<mosaic_0001>
module attributes {stable_mosaic.version = 11 : i64} {
  func.func @smarte_kernel(%arg0: memref<2x8x32xf32, #tpu.memory_space<vmem>>, %arg1: memref<2x1x8xf32, #tpu.memory_space<vmem>>, %arg2: memref<2x4x8x1xf32, #tpu.memory_space<vmem>>, %arg3: memref<4x32xf32, #tpu.memory_space<vmem>>, %arg4: memref<32x1536xbf16, #tpu.memory_space<vmem>>, %arg5: memref<64x256xbf16, #tpu.memory_space<vmem>>, %arg6: memref<128x128xbf16, #tpu.memory_space<vmem>>, %arg7: memref<16x128xf32, #tpu.memory_space<vmem>>, %arg8: memref<2x4x8x128xf32, #tpu.memory_space<vmem>>, %arg9: memref<2x4x128xf32, #tpu.memory_space<vmem>>) attributes {dimension_semantics = [], scalar_prefetch = 0 : i64, scratch_operands = 0 : i64, tpu.core_type = #tpu.core_type<tc>} {
    %c0 = arith.constant 0 : index
    %c0_0 = arith.constant 0 : index
    %c0_1 = arith.constant 0 : index
    %0 = vector.load %arg1[%c0, %c0_0, %c0_1] : memref<2x1x8xf32, #tpu.memory_space<vmem>>, vector<2x1x8xf32>
    %cst = arith.constant 0.000000e+00 : f32
    %1 = vector.broadcast %cst : f32 to vector<2x1x8xf32>
    %2 = arith.cmpf ogt, %0, %1 : vector<2x1x8xf32>
    %c0_2 = arith.constant 0 : index
    %c0_3 = arith.constant 0 : index
    %c0_4 = arith.constant 0 : index
    %3 = vector.load %arg0[%c0_2, %c0_3, %c0_4] : memref<2x8x32xf32, #tpu.memory_space<vmem>>, vector<2x8x32xf32>
    %4 = vector.shape_cast %3 : vector<2x8x32xf32> to vector<16x32xf32>
    %5 = arith.truncf %4 : vector<16x32xf32> to vector<16x32xbf16>
    %c0_5 = arith.constant 0 : index
    %c0_6 = arith.constant 0 : index
    %6 = vector.load %arg4[%c0_5, %c0_6] : memref<32x1536xbf16, #tpu.memory_space<vmem>>, vector<32x128xbf16>
    %cst_7 = arith.constant dense<0.000000e+00> : vector<16x128xf32>
    %7 = tpu.matmul %5, %6, %cst_7 {dimension_numbers = #tpu.dot_dimension_numbers<[1], [0], [0], [1], [0, 0, 1, 1], [], []>} : vector<16x32xbf16>, vector<32x128xbf16>, vector<16x128xf32> -> vector<16x128xf32>
    %8 = vector.shape_cast %7 : vector<16x128xf32> to vector<2x8x128xf32>
    %9 = vector.extract_strided_slice %8 {offsets = [0, 0, 0], sizes = [2, 8, 32], strides = [1, 1, 1]} : vector<2x8x128xf32> to vector<2x8x32xf32>
    %10 = arith.truncf %9 : vector<2x8x32xf32> to vector<2x8x32xbf16>
    %11 = vector.extract_strided_slice %8 {offsets = [0, 0, 32], sizes = [2, 8, 32], strides = [1, 1, 1]} : vector<2x8x128xf32> to vector<2x8x32xf32>
    %12 = arith.truncf %11 : vector<2x8x32xf32> to vector<2x8x32xbf16>
    %13 = vector.extract_strided_slice %8 {offsets = [0, 0, 64], sizes = [2, 8, 32], strides = [1, 1, 1]} : vector<2x8x128xf32> to vector<2x8x32xf32>
    %14 = arith.truncf %13 : vector<2x8x32xf32> to vector<2x8x32xbf16>
    "tpu.trace_start"() <{level = 10 : i32, message = "bqh,bkh->bqk"}> : () -> ()
    %cst_8 = arith.constant dense<0.000000e+00> : vector<2x8x8xf32>
    %15 = tpu.matmul %10, %12, %cst_8 {dimension_numbers = #tpu.dot_dimension_numbers<[2], [2], [1], [1], [0, 0, 0, 1, 1, 1], [0], [0]>} : vector<2x8x32xbf16>, vector<2x8x32xbf16>, vector<2x8x8xf32> -> vector<2x8x8xf32>
    "tpu.trace_stop"() : () -> ()
    %cst_9 = arith.constant 0.176776692 : f32
    %16 = vector.broadcast %cst_9 : f32 to vector<2x8x8xf32>
    %17 = arith.mulf %15, %16 : vector<2x8x8xf32>
    %cst_10 = arith.constant -1.000000e+09 : f32
    %18 = vector.shape_cast %2 : vector<2x1x8xi1> to vector<2x1x8xi1>
    %19 = vector.broadcast %18 : vector<2x1x8xi1> to vector<2x8x8xi1>
    %20 = vector.broadcast %cst_10 : f32 to vector<2x8x8xf32>
    %21 = arith.select %19, %17, %20 : vector<2x8x8xi1>, vector<2x8x8xf32>
    %cst_11 = arith.constant dense<0xFF800000> : vector<2x8xf32>
    %22 = vector.multi_reduction <maximumf>, %21, %cst_11 [2] : vector<2x8x8xf32> to vector<2x8xf32>
    %23 = vector.shape_cast %22 : vector<2x8xf32> to vector<2x8x1xf32>
    %24 = vector.broadcast %23 : vector<2x8x1xf32> to vector<2x8x8xf32>
    %25 = arith.subf %21, %24 : vector<2x8x8xf32>
    %26 = math.exp %25 : vector<2x8x8xf32>
    %cst_12 = arith.constant dense<0.000000e+00> : vector<2x8xf32>
    %27 = vector.multi_reduction <add>, %26, %cst_12 [2] : vector<2x8x8xf32> to vector<2x8xf32>
    %28 = vector.shape_cast %27 : vector<2x8xf32> to vector<2x8x1xf32>
    %29 = tpu.reciprocal %28 {approx = true} : vector<2x8x1xf32> -> vector<2x8x1xf32>
    %30 = vector.broadcast %29 : vector<2x8x1xf32> to vector<2x8x8xf32>
    %31 = arith.mulf %26, %30 : vector<2x8x8xf32>
    %32 = arith.truncf %31 : vector<2x8x8xf32> to vector<2x8x8xbf16>
    "tpu.trace_start"() <{level = 10 : i32, message = "bqk,bkh->bqh"}> : () -> ()
    %cst_13 = arith.constant dense<0.000000e+00> : vector<2x8x32xf32>
    %33 = tpu.matmul %32, %14, %cst_13 {dimension_numbers = #tpu.dot_dimension_numbers<[2], [1], [1], [2], [0, 0, 0, 1, 1, 2], [0], [0]>} : vector<2x8x8xbf16>, vector<2x8x32xbf16>, vector<2x8x32xf32> -> vector<2x8x32xf32>
    "tpu.trace_stop"() : () -> ()
    %34 = vector.shape_cast %33 : vector<2x8x32xf32> to vector<16x32xf32>
    %35 = arith.truncf %34 : vector<16x32xf32> to vector<16x32xbf16>
    %c0_14 = arith.constant 0 : index
    %c128 = arith.constant 128 : index
    %36 = vector.load %arg4[%c0_14, %c128] : memref<32x1536xbf16, #tpu.memory_space<vmem>>, vector<32x128xbf16>
    %cst_15 = arith.constant dense<0.000000e+00> : vector<16x128xf32>
    %37 = tpu.matmul %35, %36, %cst_15 {dimension_numbers = #tpu.dot_dimension_numbers<[1], [0], [0], [1], [0, 0, 1, 1], [], []>} : vector<16x32xbf16>, vector<32x128xbf16>, vector<16x128xf32> -> vector<16x128xf32>
    %38 = vector.extract_strided_slice %37 {offsets = [0, 0], sizes = [16, 32], strides = [1, 1]} : vector<16x128xf32> to vector<16x32xf32>
    %39 = arith.addf %4, %38 : vector<16x32xf32>
    %c4 = arith.constant 4 : index
    %c0_16 = arith.constant 0 : index
    %40 = vector.load %arg7[%c4, %c0_16] : memref<16x128xf32, #tpu.memory_space<vmem>>, vector<1x32xf32>
    %c5 = arith.constant 5 : index
    %c0_17 = arith.constant 0 : index
    %41 = vector.load %arg7[%c5, %c0_17] : memref<16x128xf32, #tpu.memory_space<vmem>>, vector<1x32xf32>
    %cst_18 = arith.constant dense<0.000000e+00> : vector<16xf32>
    %42 = vector.multi_reduction <add>, %39, %cst_18 [1] : vector<16x32xf32> to vector<16xf32>
    %43 = vector.shape_cast %42 : vector<16xf32> to vector<16x1xf32>
    %cst_19 = arith.constant 3.200000e+01 : f32
    %44 = vector.broadcast %cst_19 : f32 to vector<16x1xf32>
    %45 = arith.divf %43, %44 : vector<16x1xf32>
    %46 = vector.broadcast %45 : vector<16x1xf32> to vector<16x32xf32>
    %47 = arith.subf %39, %46 : vector<16x32xf32>
    %48 = arith.mulf %47, %47 : vector<16x32xf32>
    %cst_20 = arith.constant dense<0.000000e+00> : vector<16xf32>
    %49 = vector.multi_reduction <add>, %48, %cst_20 [1] : vector<16x32xf32> to vector<16xf32>
    %50 = vector.shape_cast %49 : vector<16xf32> to vector<16x1xf32>
    %cst_21 = arith.constant 3.200000e+01 : f32
    %51 = vector.broadcast %cst_21 : f32 to vector<16x1xf32>
    %52 = arith.divf %50, %51 : vector<16x1xf32>
    %53 = vector.broadcast %45 : vector<16x1xf32> to vector<16x32xf32>
    %54 = arith.subf %39, %53 : vector<16x32xf32>
    %cst_22 = arith.constant 9.99999996E-13 : f32
    %55 = vector.broadcast %cst_22 : f32 to vector<16x1xf32>
    %56 = arith.addf %52, %55 : vector<16x1xf32>
    %57 = math.rsqrt %56 : vector<16x1xf32>
    %58 = vector.broadcast %57 : vector<16x1xf32> to vector<16x32xf32>
    %59 = arith.mulf %54, %58 : vector<16x32xf32>
    %60 = vector.broadcast %40 : vector<1x32xf32> to vector<16x32xf32>
    %61 = arith.mulf %59, %60 : vector<16x32xf32>
    %62 = vector.broadcast %41 : vector<1x32xf32> to vector<16x32xf32>
    %63 = arith.addf %61, %62 : vector<16x32xf32>
    %64 = arith.truncf %63 : vector<16x32xf32> to vector<16x32xbf16>
    %c0_23 = arith.constant 0 : index
    %c256 = arith.constant 256 : index
    %65 = vector.load %arg4[%c0_23, %c256] : memref<32x1536xbf16, #tpu.memory_space<vmem>>, vector<32x128xbf16>
    %cst_24 = arith.constant dense<0.000000e+00> : vector<16x128xf32>
    %66 = tpu.matmul %64, %65, %cst_24 {dimension_numbers = #tpu.dot_dimension_numbers<[1], [0], [0], [1], [0, 0, 1, 1], [], []>} : vector<16x32xbf16>, vector<32x128xbf16>, vector<16x128xf32> -> vector<16x128xf32>
    %67 = vector.extract_strided_slice %66 {offsets = [0, 0], sizes = [16, 64], strides = [1, 1]} : vector<16x128xf32> to vector<16x64xf32>
    %c0_25 = arith.constant 0 : index
    %c0_26 = arith.constant 0 : index
    %68 = vector.load %arg7[%c0_25, %c0_26] : memref<16x128xf32, #tpu.memory_space<vmem>>, vector<1x64xf32>
    %69 = vector.broadcast %68 : vector<1x64xf32> to vector<16x64xf32>
    %70 = arith.addf %67, %69 : vector<16x64xf32>
    %71 = arith.mulf %70, %70 : vector<16x64xf32>
    %72 = arith.mulf %70, %71 : vector<16x64xf32>
    %cst_27 = arith.constant 4.471500e-02 : f32
    %73 = vector.broadcast %cst_27 : f32 to vector<16x64xf32>
    %74 = arith.mulf %73, %72 : vector<16x64xf32>
    %75 = arith.addf %70, %74 : vector<16x64xf32>
    %cst_28 = arith.constant 0.797884583 : f32
    %76 = vector.broadcast %cst_28 : f32 to vector<16x64xf32>
    %77 = arith.mulf %76, %75 : vector<16x64xf32>
    %78 = math.tanh %77 : vector<16x64xf32>
    %cst_29 = arith.constant 1.000000e+00 : f32
    %79 = vector.broadcast %cst_29 : f32 to vector<16x64xf32>
    %80 = arith.addf %79, %78 : vector<16x64xf32>
    %cst_30 = arith.constant 5.000000e-01 : f32
    %81 = vector.broadcast %cst_30 : f32 to vector<16x64xf32>
    %82 = arith.mulf %81, %80 : vector<16x64xf32>
    %83 = arith.mulf %70, %82 : vector<16x64xf32>
    %84 = arith.truncf %83 : vector<16x64xf32> to vector<16x64xbf16>
    %c0_31 = arith.constant 0 : index
    %c0_32 = arith.constant 0 : index
    %85 = vector.load %arg5[%c0_31, %c0_32] : memref<64x256xbf16, #tpu.memory_space<vmem>>, vector<64x128xbf16>
    %cst_33 = arith.constant dense<0.000000e+00> : vector<16x128xf32>
    %86 = tpu.matmul %84, %85, %cst_33 {dimension_numbers = #tpu.dot_dimension_numbers<[1], [0], [0], [1], [0, 0, 1, 1], [], []>} : vector<16x64xbf16>, vector<64x128xbf16>, vector<16x128xf32> -> vector<16x128xf32>
    %87 = vector.extract_strided_slice %86 {offsets = [0, 0], sizes = [16, 32], strides = [1, 1]} : vector<16x128xf32> to vector<16x32xf32>
    %c1 = arith.constant 1 : index
    %c0_34 = arith.constant 0 : index
    %88 = vector.load %arg7[%c1, %c0_34] : memref<16x128xf32, #tpu.memory_space<vmem>>, vector<1x32xf32>
    %89 = vector.broadcast %88 : vector<1x32xf32> to vector<16x32xf32>
    %90 = arith.addf %87, %89 : vector<16x32xf32>
    %91 = arith.addf %63, %90 : vector<16x32xf32>
    %c6 = arith.constant 6 : index
    %c0_35 = arith.constant 0 : index
    %92 = vector.load %arg7[%c6, %c0_35] : memref<16x128xf32, #tpu.memory_space<vmem>>, vector<1x32xf32>
    %c7 = arith.constant 7 : index
    %c0_36 = arith.constant 0 : index
    %93 = vector.load %arg7[%c7, %c0_36] : memref<16x128xf32, #tpu.memory_space<vmem>>, vector<1x32xf32>
    %cst_37 = arith.constant dense<0.000000e+00> : vector<16xf32>
    %94 = vector.multi_reduction <add>, %91, %cst_37 [1] : vector<16x32xf32> to vector<16xf32>
    %95 = vector.shape_cast %94 : vector<16xf32> to vector<16x1xf32>
    %cst_38 = arith.constant 3.200000e+01 : f32
    %96 = vector.broadcast %cst_38 : f32 to vector<16x1xf32>
    %97 = arith.divf %95, %96 : vector<16x1xf32>
    %98 = vector.broadcast %97 : vector<16x1xf32> to vector<16x32xf32>
    %99 = arith.subf %91, %98 : vector<16x32xf32>
    %100 = arith.mulf %99, %99 : vector<16x32xf32>
    %cst_39 = arith.constant dense<0.000000e+00> : vector<16xf32>
    %101 = vector.multi_reduction <add>, %100, %cst_39 [1] : vector<16x32xf32> to vector<16xf32>
    %102 = vector.shape_cast %101 : vector<16xf32> to vector<16x1xf32>
    %cst_40 = arith.constant 3.200000e+01 : f32
    %103 = vector.broadcast %cst_40 : f32 to vector<16x1xf32>
    %104 = arith.divf %102, %103 : vector<16x1xf32>
    %105 = vector.broadcast %97 : vector<16x1xf32> to vector<16x32xf32>
    %106 = arith.subf %91, %105 : vector<16x32xf32>
    %cst_41 = arith.constant 9.99999996E-13 : f32
    %107 = vector.broadcast %cst_41 : f32 to vector<16x1xf32>
    %108 = arith.addf %104, %107 : vector<16x1xf32>
    %109 = math.rsqrt %108 : vector<16x1xf32>
    %110 = vector.broadcast %109 : vector<16x1xf32> to vector<16x32xf32>
    %111 = arith.mulf %106, %110 : vector<16x32xf32>
    %112 = vector.broadcast %92 : vector<1x32xf32> to vector<16x32xf32>
    %113 = arith.mulf %111, %112 : vector<16x32xf32>
    %114 = vector.broadcast %93 : vector<1x32xf32> to vector<16x32xf32>
    %115 = arith.addf %113, %114 : vector<16x32xf32>
    %c0_42 = arith.constant 0 : index
    %c0_43 = arith.constant 0 : index
    %116 = vector.load %arg3[%c0_42, %c0_43] : memref<4x32xf32, #tpu.memory_space<vmem>>, vector<4x32xf32>
    %117 = arith.truncf %116 : vector<4x32xf32> to vector<4x32xbf16>
    %c0_44 = arith.constant 0 : index
    %c384 = arith.constant 384 : index
    %118 = vector.load %arg4[%c0_44, %c384] : memref<32x1536xbf16, #tpu.memory_space<vmem>>, vector<32x128xbf16>
    %cst_45 = arith.constant dense<0.000000e+00> : vector<4x128xf32>
    %119 = tpu.matmul %117, %118, %cst_45 {dimension_numbers = #tpu.dot_dimension_numbers<[1], [0], [0], [1], [0, 0, 1, 1], [], []>} : vector<4x32xbf16>, vector<32x128xbf16>, vector<4x128xf32> -> vector<4x128xf32>
    %120 = vector.extract_strided_slice %119 {offsets = [0, 0], sizes = [4, 32], strides = [1, 1]} : vector<4x128xf32> to vector<4x32xf32>
    %121 = arith.truncf %120 : vector<4x32xf32> to vector<4x32xbf16>
    %122 = vector.extract_strided_slice %119 {offsets = [0, 32], sizes = [4, 32], strides = [1, 1]} : vector<4x128xf32> to vector<4x32xf32>
    %123 = arith.truncf %122 : vector<4x32xf32> to vector<4x32xbf16>
    %124 = vector.extract_strided_slice %119 {offsets = [0, 64], sizes = [4, 32], strides = [1, 1]} : vector<4x128xf32> to vector<4x32xf32>
    %125 = arith.truncf %124 : vector<4x32xf32> to vector<4x32xbf16>
    %cst_46 = arith.constant dense<0.000000e+00> : vector<4x4xf32>
    %126 = tpu.matmul %121, %123, %cst_46 {dimension_numbers = #tpu.dot_dimension_numbers<[1], [1], [0], [0], [0, 0, 1, 0], [], []>} : vector<4x32xbf16>, vector<4x32xbf16>, vector<4x4xf32> -> vector<4x4xf32>
    %cst_47 = arith.constant 0.176776692 : f32
    %127 = vector.broadcast %cst_47 : f32 to vector<4x4xf32>
    %128 = arith.mulf %126, %127 : vector<4x4xf32>
    %cst_48 = arith.constant dense<0xFF800000> : vector<4xf32>
    %129 = vector.multi_reduction <maximumf>, %128, %cst_48 [1] : vector<4x4xf32> to vector<4xf32>
    %130 = vector.shape_cast %129 : vector<4xf32> to vector<4x1xf32>
    %131 = vector.broadcast %130 : vector<4x1xf32> to vector<4x4xf32>
    %132 = arith.subf %128, %131 : vector<4x4xf32>
    %133 = math.exp %132 : vector<4x4xf32>
    %cst_49 = arith.constant dense<0.000000e+00> : vector<4xf32>
    %134 = vector.multi_reduction <add>, %133, %cst_49 [1] : vector<4x4xf32> to vector<4xf32>
    %135 = vector.shape_cast %134 : vector<4xf32> to vector<4x1xf32>
    %136 = tpu.reciprocal %135 {approx = true} : vector<4x1xf32> -> vector<4x1xf32>
    %137 = vector.broadcast %136 : vector<4x1xf32> to vector<4x4xf32>
    %138 = arith.mulf %133, %137 : vector<4x4xf32>
    %139 = arith.truncf %138 : vector<4x4xf32> to vector<4x4xbf16>
    %cst_50 = arith.constant dense<0.000000e+00> : vector<4x32xf32>
    %140 = tpu.matmul %139, %125, %cst_50 {dimension_numbers = #tpu.dot_dimension_numbers<[1], [0], [0], [1], [0, 0, 1, 1], [], []>} : vector<4x4xbf16>, vector<4x32xbf16>, vector<4x32xf32> -> vector<4x32xf32>
    %141 = arith.truncf %140 : vector<4x32xf32> to vector<4x32xbf16>
    %c0_51 = arith.constant 0 : index
    %c512 = arith.constant 512 : index
    %142 = vector.load %arg4[%c0_51, %c512] : memref<32x1536xbf16, #tpu.memory_space<vmem>>, vector<32x128xbf16>
    %cst_52 = arith.constant dense<0.000000e+00> : vector<4x128xf32>
    %143 = tpu.matmul %141, %142, %cst_52 {dimension_numbers = #tpu.dot_dimension_numbers<[1], [0], [0], [1], [0, 0, 1, 1], [], []>} : vector<4x32xbf16>, vector<32x128xbf16>, vector<4x128xf32> -> vector<4x128xf32>
    %144 = vector.extract_strided_slice %143 {offsets = [0, 0], sizes = [4, 32], strides = [1, 1]} : vector<4x128xf32> to vector<4x32xf32>
    %145 = arith.addf %116, %144 : vector<4x32xf32>
    %c8 = arith.constant 8 : index
    %c0_53 = arith.constant 0 : index
    %146 = vector.load %arg7[%c8, %c0_53] : memref<16x128xf32, #tpu.memory_space<vmem>>, vector<1x32xf32>
    %c9 = arith.constant 9 : index
    %c0_54 = arith.constant 0 : index
    %147 = vector.load %arg7[%c9, %c0_54] : memref<16x128xf32, #tpu.memory_space<vmem>>, vector<1x32xf32>
    %cst_55 = arith.constant dense<0.000000e+00> : vector<4xf32>
    %148 = vector.multi_reduction <add>, %145, %cst_55 [1] : vector<4x32xf32> to vector<4xf32>
    %149 = vector.shape_cast %148 : vector<4xf32> to vector<4x1xf32>
    %cst_56 = arith.constant 3.200000e+01 : f32
    %150 = vector.broadcast %cst_56 : f32 to vector<4x1xf32>
    %151 = arith.divf %149, %150 : vector<4x1xf32>
    %152 = vector.broadcast %151 : vector<4x1xf32> to vector<4x32xf32>
    %153 = arith.subf %145, %152 : vector<4x32xf32>
    %154 = arith.mulf %153, %153 : vector<4x32xf32>
    %cst_57 = arith.constant dense<0.000000e+00> : vector<4xf32>
    %155 = vector.multi_reduction <add>, %154, %cst_57 [1] : vector<4x32xf32> to vector<4xf32>
    %156 = vector.shape_cast %155 : vector<4xf32> to vector<4x1xf32>
    %cst_58 = arith.constant 3.200000e+01 : f32
    %157 = vector.broadcast %cst_58 : f32 to vector<4x1xf32>
    %158 = arith.divf %156, %157 : vector<4x1xf32>
    %159 = vector.broadcast %151 : vector<4x1xf32> to vector<4x32xf32>
    %160 = arith.subf %145, %159 : vector<4x32xf32>
    %cst_59 = arith.constant 9.99999996E-13 : f32
    %161 = vector.broadcast %cst_59 : f32 to vector<4x1xf32>
    %162 = arith.addf %158, %161 : vector<4x1xf32>
    %163 = math.rsqrt %162 : vector<4x1xf32>
    %164 = vector.broadcast %163 : vector<4x1xf32> to vector<4x32xf32>
    %165 = arith.mulf %160, %164 : vector<4x32xf32>
    %166 = vector.broadcast %146 : vector<1x32xf32> to vector<4x32xf32>
    %167 = arith.mulf %165, %166 : vector<4x32xf32>
    %168 = vector.broadcast %147 : vector<1x32xf32> to vector<4x32xf32>
    %169 = arith.addf %167, %168 : vector<4x32xf32>
    %170 = arith.truncf %169 : vector<4x32xf32> to vector<4x32xbf16>
    %c0_60 = arith.constant 0 : index
    %c640 = arith.constant 640 : index
    %171 = vector.load %arg4[%c0_60, %c640] : memref<32x1536xbf16, #tpu.memory_space<vmem>>, vector<32x128xbf16>
    %cst_61 = arith.constant dense<0.000000e+00> : vector<4x128xf32>
    %172 = tpu.matmul %170, %171, %cst_61 {dimension_numbers = #tpu.dot_dimension_numbers<[1], [0], [0], [1], [0, 0, 1, 1], [], []>} : vector<4x32xbf16>, vector<32x128xbf16>, vector<4x128xf32> -> vector<4x128xf32>
    %173 = vector.extract_strided_slice %172 {offsets = [0, 0], sizes = [4, 32], strides = [1, 1]} : vector<4x128xf32> to vector<4x32xf32>
    %174 = arith.truncf %173 : vector<4x32xf32> to vector<4x32xbf16>
    %175 = vector.shape_cast %174 : vector<4x32xbf16> to vector<1x4x32xbf16>
    %176 = vector.shape_cast %175 : vector<1x4x32xbf16> to vector<1x4x32xbf16>
    %177 = vector.broadcast %176 : vector<1x4x32xbf16> to vector<2x4x32xbf16>
    %178 = arith.truncf %115 : vector<16x32xf32> to vector<16x32xbf16>
    %c0_62 = arith.constant 0 : index
    %c1024 = arith.constant 1024 : index
    %179 = vector.load %arg4[%c0_62, %c1024] : memref<32x1536xbf16, #tpu.memory_space<vmem>>, vector<32x256xbf16>
    %cst_63 = arith.constant dense<0.000000e+00> : vector<16x256xf32>
    %180 = tpu.matmul %178, %179, %cst_63 {dimension_numbers = #tpu.dot_dimension_numbers<[1], [0], [0], [1], [0, 0, 1, 1], [], []>} : vector<16x32xbf16>, vector<32x256xbf16>, vector<16x256xf32> -> vector<16x256xf32>
    %181 = vector.extract_strided_slice %180 {offsets = [0, 0], sizes = [16, 32], strides = [1, 1]} : vector<16x256xf32> to vector<16x32xf32>
    %182 = vector.shape_cast %181 : vector<16x32xf32> to vector<2x8x32xf32>
    %183 = arith.truncf %182 : vector<2x8x32xf32> to vector<2x8x32xbf16>
    %184 = vector.extract_strided_slice %180 {offsets = [0, 32], sizes = [16, 32], strides = [1, 1]} : vector<16x256xf32> to vector<16x32xf32>
    %185 = vector.shape_cast %184 : vector<16x32xf32> to vector<2x8x32xf32>
    %186 = arith.truncf %185 : vector<2x8x32xf32> to vector<2x8x32xbf16>
    %187 = vector.extract_strided_slice %180 {offsets = [0, 128], sizes = [16, 128], strides = [1, 1]} : vector<16x256xf32> to vector<16x128xf32>
    "tpu.trace_start"() <{level = 10 : i32, message = "bth,bsh->bts"}> : () -> ()
    %cst_64 = arith.constant dense<0.000000e+00> : vector<2x4x8xf32>
    %188 = tpu.matmul %177, %183, %cst_64 {dimension_numbers = #tpu.dot_dimension_numbers<[2], [2], [1], [1], [0, 0, 0, 1, 1, 1], [0], [0]>} : vector<2x4x32xbf16>, vector<2x8x32xbf16>, vector<2x4x8xf32> -> vector<2x4x8xf32>
    "tpu.trace_stop"() : () -> ()
    %cst_65 = arith.constant 0.176776692 : f32
    %189 = vector.broadcast %cst_65 : f32 to vector<2x4x8xf32>
    %190 = arith.mulf %188, %189 : vector<2x4x8xf32>
    %cst_66 = arith.constant -1.000000e+09 : f32
    %191 = vector.shape_cast %2 : vector<2x1x8xi1> to vector<2x1x8xi1>
    %192 = vector.broadcast %191 : vector<2x1x8xi1> to vector<2x4x8xi1>
    %193 = vector.broadcast %cst_66 : f32 to vector<2x4x8xf32>
    %194 = arith.select %192, %190, %193 : vector<2x4x8xi1>, vector<2x4x8xf32>
    %cst_67 = arith.constant dense<0xFF800000> : vector<2x4xf32>
    %195 = vector.multi_reduction <maximumf>, %194, %cst_67 [2] : vector<2x4x8xf32> to vector<2x4xf32>
    %196 = vector.shape_cast %195 : vector<2x4xf32> to vector<2x4x1xf32>
    %197 = vector.broadcast %196 : vector<2x4x1xf32> to vector<2x4x8xf32>
    %198 = arith.subf %194, %197 : vector<2x4x8xf32>
    %199 = math.exp %198 : vector<2x4x8xf32>
    %cst_68 = arith.constant dense<0.000000e+00> : vector<2x4xf32>
    %200 = vector.multi_reduction <add>, %199, %cst_68 [2] : vector<2x4x8xf32> to vector<2x4xf32>
    %201 = vector.shape_cast %200 : vector<2x4xf32> to vector<2x4x1xf32>
    %202 = tpu.reciprocal %201 {approx = true} : vector<2x4x1xf32> -> vector<2x4x1xf32>
    %203 = vector.broadcast %202 : vector<2x4x1xf32> to vector<2x4x8xf32>
    %204 = arith.mulf %199, %203 : vector<2x4x8xf32>
    %205 = arith.truncf %204 : vector<2x4x8xf32> to vector<2x4x8xbf16>
    "tpu.trace_start"() <{level = 10 : i32, message = "bts,bsh->bth"}> : () -> ()
    %cst_69 = arith.constant dense<0.000000e+00> : vector<2x4x32xf32>
    %206 = tpu.matmul %205, %186, %cst_69 {dimension_numbers = #tpu.dot_dimension_numbers<[2], [1], [1], [2], [0, 0, 0, 1, 1, 2], [0], [0]>} : vector<2x4x8xbf16>, vector<2x8x32xbf16>, vector<2x4x32xf32> -> vector<2x4x32xf32>
    "tpu.trace_stop"() : () -> ()
    %207 = vector.shape_cast %206 : vector<2x4x32xf32> to vector<8x32xf32>
    %208 = vector.shape_cast %169 : vector<4x32xf32> to vector<1x4x32xf32>
    %209 = vector.shape_cast %208 : vector<1x4x32xf32> to vector<1x4x32xf32>
    %210 = vector.broadcast %209 : vector<1x4x32xf32> to vector<2x4x32xf32>
    %211 = vector.shape_cast %210 : vector<2x4x32xf32> to vector<8x32xf32>
    %212 = arith.truncf %207 : vector<8x32xf32> to vector<8x32xbf16>
    %c0_70 = arith.constant 0 : index
    %c768 = arith.constant 768 : index
    %213 = vector.load %arg4[%c0_70, %c768] : memref<32x1536xbf16, #tpu.memory_space<vmem>>, vector<32x128xbf16>
    %cst_71 = arith.constant dense<0.000000e+00> : vector<8x128xf32>
    %214 = tpu.matmul %212, %213, %cst_71 {dimension_numbers = #tpu.dot_dimension_numbers<[1], [0], [0], [1], [0, 0, 1, 1], [], []>} : vector<8x32xbf16>, vector<32x128xbf16>, vector<8x128xf32> -> vector<8x128xf32>
    %215 = vector.extract_strided_slice %214 {offsets = [0, 0], sizes = [8, 32], strides = [1, 1]} : vector<8x128xf32> to vector<8x32xf32>
    %216 = arith.addf %211, %215 : vector<8x32xf32>
    %c10 = arith.constant 10 : index
    %c0_72 = arith.constant 0 : index
    %217 = vector.load %arg7[%c10, %c0_72] : memref<16x128xf32, #tpu.memory_space<vmem>>, vector<1x32xf32>
    %c11 = arith.constant 11 : index
    %c0_73 = arith.constant 0 : index
    %218 = vector.load %arg7[%c11, %c0_73] : memref<16x128xf32, #tpu.memory_space<vmem>>, vector<1x32xf32>
    %cst_74 = arith.constant dense<0.000000e+00> : vector<8xf32>
    %219 = vector.multi_reduction <add>, %216, %cst_74 [1] : vector<8x32xf32> to vector<8xf32>
    %220 = vector.shape_cast %219 : vector<8xf32> to vector<8x1xf32>
    %cst_75 = arith.constant 3.200000e+01 : f32
    %221 = vector.broadcast %cst_75 : f32 to vector<8x1xf32>
    %222 = arith.divf %220, %221 : vector<8x1xf32>
    %223 = vector.broadcast %222 : vector<8x1xf32> to vector<8x32xf32>
    %224 = arith.subf %216, %223 : vector<8x32xf32>
    %225 = arith.mulf %224, %224 : vector<8x32xf32>
    %cst_76 = arith.constant dense<0.000000e+00> : vector<8xf32>
    %226 = vector.multi_reduction <add>, %225, %cst_76 [1] : vector<8x32xf32> to vector<8xf32>
    %227 = vector.shape_cast %226 : vector<8xf32> to vector<8x1xf32>
    %cst_77 = arith.constant 3.200000e+01 : f32
    %228 = vector.broadcast %cst_77 : f32 to vector<8x1xf32>
    %229 = arith.divf %227, %228 : vector<8x1xf32>
    %230 = vector.broadcast %222 : vector<8x1xf32> to vector<8x32xf32>
    %231 = arith.subf %216, %230 : vector<8x32xf32>
    %cst_78 = arith.constant 9.99999996E-13 : f32
    %232 = vector.broadcast %cst_78 : f32 to vector<8x1xf32>
    %233 = arith.addf %229, %232 : vector<8x1xf32>
    %234 = math.rsqrt %233 : vector<8x1xf32>
    %235 = vector.broadcast %234 : vector<8x1xf32> to vector<8x32xf32>
    %236 = arith.mulf %231, %235 : vector<8x32xf32>
    %237 = vector.broadcast %217 : vector<1x32xf32> to vector<8x32xf32>
    %238 = arith.mulf %236, %237 : vector<8x32xf32>
    %239 = vector.broadcast %218 : vector<1x32xf32> to vector<8x32xf32>
    %240 = arith.addf %238, %239 : vector<8x32xf32>
    %241 = arith.truncf %240 : vector<8x32xf32> to vector<8x32xbf16>
    %c0_79 = arith.constant 0 : index
    %c896 = arith.constant 896 : index
    %242 = vector.load %arg4[%c0_79, %c896] : memref<32x1536xbf16, #tpu.memory_space<vmem>>, vector<32x128xbf16>
    %cst_80 = arith.constant dense<0.000000e+00> : vector<8x128xf32>
    %243 = tpu.matmul %241, %242, %cst_80 {dimension_numbers = #tpu.dot_dimension_numbers<[1], [0], [0], [1], [0, 0, 1, 1], [], []>} : vector<8x32xbf16>, vector<32x128xbf16>, vector<8x128xf32> -> vector<8x128xf32>
    %244 = vector.extract_strided_slice %243 {offsets = [0, 0], sizes = [8, 64], strides = [1, 1]} : vector<8x128xf32> to vector<8x64xf32>
    %c2 = arith.constant 2 : index
    %c0_81 = arith.constant 0 : index
    %245 = vector.load %arg7[%c2, %c0_81] : memref<16x128xf32, #tpu.memory_space<vmem>>, vector<1x64xf32>
    %246 = vector.broadcast %245 : vector<1x64xf32> to vector<8x64xf32>
    %247 = arith.addf %244, %246 : vector<8x64xf32>
    %248 = arith.mulf %247, %247 : vector<8x64xf32>
    %249 = arith.mulf %247, %248 : vector<8x64xf32>
    %cst_82 = arith.constant 4.471500e-02 : f32
    %250 = vector.broadcast %cst_82 : f32 to vector<8x64xf32>
    %251 = arith.mulf %250, %249 : vector<8x64xf32>
    %252 = arith.addf %247, %251 : vector<8x64xf32>
    %cst_83 = arith.constant 0.797884583 : f32
    %253 = vector.broadcast %cst_83 : f32 to vector<8x64xf32>
    %254 = arith.mulf %253, %252 : vector<8x64xf32>
    %255 = math.tanh %254 : vector<8x64xf32>
    %cst_84 = arith.constant 1.000000e+00 : f32
    %256 = vector.broadcast %cst_84 : f32 to vector<8x64xf32>
    %257 = arith.addf %256, %255 : vector<8x64xf32>
    %cst_85 = arith.constant 5.000000e-01 : f32
    %258 = vector.broadcast %cst_85 : f32 to vector<8x64xf32>
    %259 = arith.mulf %258, %257 : vector<8x64xf32>
    %260 = arith.mulf %247, %259 : vector<8x64xf32>
    %261 = arith.truncf %260 : vector<8x64xf32> to vector<8x64xbf16>
    %c0_86 = arith.constant 0 : index
    %c128_87 = arith.constant 128 : index
    %262 = vector.load %arg5[%c0_86, %c128_87] : memref<64x256xbf16, #tpu.memory_space<vmem>>, vector<64x128xbf16>
    %cst_88 = arith.constant dense<0.000000e+00> : vector<8x128xf32>
    %263 = tpu.matmul %261, %262, %cst_88 {dimension_numbers = #tpu.dot_dimension_numbers<[1], [0], [0], [1], [0, 0, 1, 1], [], []>} : vector<8x64xbf16>, vector<64x128xbf16>, vector<8x128xf32> -> vector<8x128xf32>
    %264 = vector.extract_strided_slice %263 {offsets = [0, 0], sizes = [8, 32], strides = [1, 1]} : vector<8x128xf32> to vector<8x32xf32>
    %c3 = arith.constant 3 : index
    %c0_89 = arith.constant 0 : index
    %265 = vector.load %arg7[%c3, %c0_89] : memref<16x128xf32, #tpu.memory_space<vmem>>, vector<1x32xf32>
    %266 = vector.broadcast %265 : vector<1x32xf32> to vector<8x32xf32>
    %267 = arith.addf %264, %266 : vector<8x32xf32>
    %268 = arith.addf %240, %267 : vector<8x32xf32>
    %c12 = arith.constant 12 : index
    %c0_90 = arith.constant 0 : index
    %269 = vector.load %arg7[%c12, %c0_90] : memref<16x128xf32, #tpu.memory_space<vmem>>, vector<1x32xf32>
    %c13 = arith.constant 13 : index
    %c0_91 = arith.constant 0 : index
    %270 = vector.load %arg7[%c13, %c0_91] : memref<16x128xf32, #tpu.memory_space<vmem>>, vector<1x32xf32>
    %cst_92 = arith.constant dense<0.000000e+00> : vector<8xf32>
    %271 = vector.multi_reduction <add>, %268, %cst_92 [1] : vector<8x32xf32> to vector<8xf32>
    %272 = vector.shape_cast %271 : vector<8xf32> to vector<8x1xf32>
    %cst_93 = arith.constant 3.200000e+01 : f32
    %273 = vector.broadcast %cst_93 : f32 to vector<8x1xf32>
    %274 = arith.divf %272, %273 : vector<8x1xf32>
    %275 = vector.broadcast %274 : vector<8x1xf32> to vector<8x32xf32>
    %276 = arith.subf %268, %275 : vector<8x32xf32>
    %277 = arith.mulf %276, %276 : vector<8x32xf32>
    %cst_94 = arith.constant dense<0.000000e+00> : vector<8xf32>
    %278 = vector.multi_reduction <add>, %277, %cst_94 [1] : vector<8x32xf32> to vector<8xf32>
    %279 = vector.shape_cast %278 : vector<8xf32> to vector<8x1xf32>
    %cst_95 = arith.constant 3.200000e+01 : f32
    %280 = vector.broadcast %cst_95 : f32 to vector<8x1xf32>
    %281 = arith.divf %279, %280 : vector<8x1xf32>
    %282 = vector.broadcast %274 : vector<8x1xf32> to vector<8x32xf32>
    %283 = arith.subf %268, %282 : vector<8x32xf32>
    %cst_96 = arith.constant 9.99999996E-13 : f32
    %284 = vector.broadcast %cst_96 : f32 to vector<8x1xf32>
    %285 = arith.addf %281, %284 : vector<8x1xf32>
    %286 = math.rsqrt %285 : vector<8x1xf32>
    %287 = vector.broadcast %286 : vector<8x1xf32> to vector<8x32xf32>
    %288 = arith.mulf %283, %287 : vector<8x32xf32>
    %289 = vector.broadcast %269 : vector<1x32xf32> to vector<8x32xf32>
    %290 = arith.mulf %288, %289 : vector<8x32xf32>
    %291 = vector.broadcast %270 : vector<1x32xf32> to vector<8x32xf32>
    %292 = arith.addf %290, %291 : vector<8x32xf32>
    %293 = arith.truncf %292 : vector<8x32xf32> to vector<8x32xbf16>
    %c0_97 = arith.constant 0 : index
    %c1280 = arith.constant 1280 : index
    %294 = vector.load %arg4[%c0_97, %c1280] : memref<32x1536xbf16, #tpu.memory_space<vmem>>, vector<32x256xbf16>
    %cst_98 = arith.constant dense<0.000000e+00> : vector<8x256xf32>
    %295 = tpu.matmul %293, %294, %cst_98 {dimension_numbers = #tpu.dot_dimension_numbers<[1], [0], [0], [1], [0, 0, 1, 1], [], []>} : vector<8x32xbf16>, vector<32x256xbf16>, vector<8x256xf32> -> vector<8x256xf32>
    %296 = vector.extract_strided_slice %295 {offsets = [0, 128], sizes = [8, 128], strides = [1, 1]} : vector<8x256xf32> to vector<8x128xf32>
    %c14 = arith.constant 14 : index
    %c0_99 = arith.constant 0 : index
    %297 = vector.load %arg7[%c14, %c0_99] : memref<16x128xf32, #tpu.memory_space<vmem>>, vector<1x128xf32>
    %298 = vector.broadcast %297 : vector<1x128xf32> to vector<8x128xf32>
    %299 = arith.addf %296, %298 : vector<8x128xf32>
    %300 = vector.shape_cast %299 : vector<8x128xf32> to vector<2x4x128xf32>
    %c0_100 = arith.constant 0 : index
    %c0_101 = arith.constant 0 : index
    %c0_102 = arith.constant 0 : index
    %301 = vector.load %arg9[%c0_100, %c0_101, %c0_102] : memref<2x4x128xf32, #tpu.memory_space<vmem>>, vector<2x4x128xf32>
    tpu.vector_store %arg9[%c0_100, %c0_101, %c0_102], %300 {strides = array<i32>} : memref<2x4x128xf32, #tpu.memory_space<vmem>>, vector<2x4x128xf32>,
    %302 = vector.extract_strided_slice %295 {offsets = [0, 0], sizes = [8, 128], strides = [1, 1]} : vector<8x256xf32> to vector<8x128xf32>
    %c15 = arith.constant 15 : index
    %c0_103 = arith.constant 0 : index
    %303 = vector.load %arg7[%c15, %c0_103] : memref<16x128xf32, #tpu.memory_space<vmem>>, vector<1x128xf32>
    %304 = vector.shape_cast %302 : vector<8x128xf32> to vector<2x4x1x128xf32>
    %305 = vector.shape_cast %187 : vector<16x128xf32> to vector<2x1x8x128xf32>
    %306 = vector.broadcast %304 : vector<2x4x1x128xf32> to vector<2x4x8x128xf32>
    %307 = vector.broadcast %305 : vector<2x1x8x128xf32> to vector<2x4x8x128xf32>
    %308 = arith.addf %306, %307 : vector<2x4x8x128xf32>
    %309 = vector.shape_cast %303 : vector<1x128xf32> to vector<1x1x1x128xf32>
    %310 = vector.broadcast %309 : vector<1x1x1x128xf32> to vector<2x4x8x128xf32>
    %311 = arith.addf %308, %310 : vector<2x4x8x128xf32>
    %312 = math.tanh %311 : vector<2x4x8x128xf32>
    %313 = vector.shape_cast %312 : vector<2x4x8x128xf32> to vector<64x128xf32>
    %314 = arith.truncf %313 : vector<64x128xf32> to vector<64x128xbf16>
    %c0_104 = arith.constant 0 : index
    %c0_105 = arith.constant 0 : index
    %315 = vector.load %arg6[%c0_104, %c0_105] : memref<128x128xbf16, #tpu.memory_space<vmem>>, vector<128x128xbf16>
    %cst_106 = arith.constant dense<0.000000e+00> : vector<64x128xf32>
    %316 = tpu.matmul %314, %315, %cst_106 {dimension_numbers = #tpu.dot_dimension_numbers<[1], [0], [0], [1], [0, 0, 1, 1], [], []>} : vector<64x128xbf16>, vector<128x128xbf16>, vector<64x128xf32> -> vector<64x128xf32>
    %317 = vector.shape_cast %316 : vector<64x128xf32> to vector<2x4x8x128xf32>
    %c0_107 = arith.constant 0 : index
    %c0_108 = arith.constant 0 : index
    %c0_109 = arith.constant 0 : index
    %c0_110 = arith.constant 0 : index
    %318 = vector.load %arg2[%c0_107, %c0_108, %c0_109, %c0_110] : memref<2x4x8x1xf32, #tpu.memory_space<vmem>>, vector<2x4x8x1xf32>
    %cst_111 = arith.constant 0.000000e+00 : f32
    %319 = vector.broadcast %cst_111 : f32 to vector<2x4x8x1xf32>
    %320 = arith.cmpf ogt, %318, %319 : vector<2x4x8x1xf32>
    %cst_112 = arith.constant -1.000000e+04 : f32
    %321 = vector.shape_cast %320 : vector<2x4x8x1xi1> to vector<2x4x8x1xi1>
    %322 = vector.broadcast %321 : vector<2x4x8x1xi1> to vector<2x4x8x128xi1>
    %323 = vector.broadcast %cst_112 : f32 to vector<2x4x8x128xf32>
    %324 = arith.select %322, %317, %323 : vector<2x4x8x128xi1>, vector<2x4x8x128xf32>
    %c0_113 = arith.constant 0 : index
    %c0_114 = arith.constant 0 : index
    %c0_115 = arith.constant 0 : index
    %c0_116 = arith.constant 0 : index
    %325 = vector.load %arg8[%c0_113, %c0_114, %c0_115, %c0_116] : memref<2x4x8x128xf32, #tpu.memory_space<vmem>>, vector<2x4x8x128xf32>
    tpu.vector_store %arg8[%c0_113, %c0_114, %c0_115, %c0_116], %324 {strides = array<i32>} : memref<2x4x8x128xf32, #tpu.memory_space<vmem>>, vector<2x4x8x128xf32>,
    return
  }
}

</mosaic_0001>

<llo_original>
// kernel: smarte_forward.1
$region0: #{smarte_forward.1}
  #allocation0 [shape = 'u32[]', space=smem, size = 0x4, offset = 0x4, fixed_abs, tag = 'smem constant byte address 0x4 - core index']
  #allocation1 [shape = 'u32[144,128]{1,0:T(1,128)}', space=vmem, size = 0x12000, scoped, tag = 'internal scratch']
  %s0 = inlined_call_operand.vmem [shape: f32[2,8,32], index: 0, kind: input, shape index: {}]
  %s1 = inlined_call_operand.vmem [shape: f32[2,1,8], index: 1, kind: input, shape index: {}]
  %s2 = inlined_call_operand.vmem [shape: f32[2,4,8,1], index: 2, kind: input, shape index: {}]
  %s3 = inlined_call_operand.vmem [shape: f32[4,32], index: 3, kind: input, shape index: {}]
  %s4 = inlined_call_operand.vmem [shape: bf16[32,1536], index: 4, kind: input, shape index: {}]
  %s5 = inlined_call_operand.vmem [shape: bf16[64,256], index: 5, kind: input, shape index: {}]
  %s6 = inlined_call_operand.vmem [shape: bf16[128,128], index: 6, kind: input, shape index: {}]
  %s7 = inlined_call_operand.vmem [shape: f32[16,128], index: 7, kind: input, shape index: {}]
  %s8 = inlined_call_operand.vmem [shape: f32[2,4,8,128], index: 8, kind: output, shape index: {0}]
  %s9 = inlined_call_operand.hbm [shape: f32[2,4,128], index: 9, kind: output, shape index: {1}]
  %10 = xla_tuple %s8, %s9
  %s11 = sld [smem:[#allocation0]]
  $region50: #{smarte_forward.1} parent=0
    _
  %s13 = ssub.s32 1, %s11
  %s14 = scalar_select 0, %s13, %s11
  $region1: #{smarte_forward.1} parent=0
    #allocation2 [shape = 'u8[4096]{0}', space=vmem, size = 0x1000, scoped, tag = 'output window, operand 1, single buffered']
    #allocation3 [shape = 's32[1]{0}', space=sflag, size = 0x4, scoped, tag = 'scoped memory for smarte_forward.1']
    %15 = vsyncpa [#allocation3], 0
    // Predicated region
    $region2: #{smarte_forward.1} parent=1 // pred_check
      _
    $region3: #{smarte_forward.1} parent=1 // pred_check_branch
      %17 = sbr.rel (0) target = $region5
    $region4: #{smarte_forward.1} parent=1 // pred_region
      _
    $region5: #{smarte_forward.1} parent=1 // pred_fallthru
      _
    // Predicated region
    $region6: #{smarte_forward.1} parent=1 // pred_check
      _
    $region7: #{smarte_forward.1} parent=1 // pred_check_branch
      %19 = sbr.rel (0) target = $region9
    $region8: #{smarte_forward.1} parent=1 // pred_region
      _
    $region9: #{smarte_forward.1} parent=1 // pred_fallthru
      _
    // Predicated region
    $region10: #{smarte_forward.1} parent=1 // pred_check
      _
    $region11: #{smarte_forward.1} parent=1 // pred_check_branch
      %21 = sbr.rel (0) target = $region13
    $region12: #{smarte_forward.1} parent=1 // pred_region
      _
    $region13: #{smarte_forward.1} parent=1 // pred_fallthru
      _
    // Predicated region
    $region14: #{smarte_forward.1} parent=1 // pred_check
      _
    $region15: #{smarte_forward.1} parent=1 // pred_check_branch
      %23 = sbr.rel (0) target = $region17
    $region16: #{smarte_forward.1} parent=1 // pred_region
      _
    $region17: #{smarte_forward.1} parent=1 // pred_fallthru
      _
    // Predicated region
    $region18: #{smarte_forward.1} parent=1 // pred_check
      _
    $region19: #{smarte_forward.1} parent=1 // pred_check_branch
      %25 = sbr.rel (0) target = $region21
    $region20: #{smarte_forward.1} parent=1 // pred_region
      _
    $region21: #{smarte_forward.1} parent=1 // pred_fallthru
      _
    // Predicated region
    $region22: #{smarte_forward.1} parent=1 // pred_check
      _
    $region23: #{smarte_forward.1} parent=1 // pred_check_branch
      %27 = sbr.rel (0) target = $region25
    $region24: #{smarte_forward.1} parent=1 // pred_region
      _
    $region25: #{smarte_forward.1} parent=1 // pred_fallthru
      _
    // Predicated region
    $region26: #{smarte_forward.1} parent=1 // pred_check
      _
    $region27: #{smarte_forward.1} parent=1 // pred_check_branch
      %29 = sbr.rel (0) target = $region29
    $region28: #{smarte_forward.1} parent=1 // pred_region
      _
    $region29: #{smarte_forward.1} parent=1 // pred_fallthru
      _
    // Predicated region
    $region30: #{smarte_forward.1} parent=1 // pred_check
      _
    $region31: #{smarte_forward.1} parent=1 // pred_check_branch
      %31 = sbr.rel (0) target = $region33
    $region32: #{smarte_forward.1} parent=1 // pred_region
      _
    $region33: #{smarte_forward.1} parent=1 // pred_fallthru
      _
    %v33 = vld [vmem:[%s1] sm:$0x1]
    %v34 = vld [vmem:[%s1 + $0x1] sm:$0x1]
    %vm35 = vcmp.gt.f32.partialorder %v33, 0.0
    %vm36 = vcmp.gt.f32.partialorder %v34, 0.0
    %v37 = vld [vmem:[%s0] sm:$0xff]
    %v38 = vld [vmem:[%s0 + $0x8] sm:$0xff]
    %v39 = vpack.c.bf16 %v38, %v37
    %v40 = vld [vmem:[%s4] sm:$0xf]
    %v41 = vld [vmem:[%s4 + $0x30] sm:$0xf]
    %v42 = vld [vmem:[%s4 + $0x60] sm:$0xf]
    %v43 = vld [vmem:[%s4 + $0x90] sm:$0xf]
    %v48 = vunpack.c.l.b16 %v40
    %v49 = vunpack.c.l.b16 %v41
    %v50 = vunpack.c.l.b16 %v42
    %v51 = vunpack.c.l.b16 %v43
    %v52 = vpack.c.b16 %v49, %v48
    %v53 = vpack.c.b16 %v51, %v50
    %vm56 = vcmask 261120
    %v58 = vsel %vm56, %v39, 0
    %60 = vmatprep.subr.bf16.mxu0 0
    %61 = vmatpush1.bf16.msra.mxu0 %v52
    %62 = vmatprep.subr.bf16.mxu0 0
    %63 = vmatpush1.bf16.msra.mxu0 %v53
    %64 = vmatprep.subr.bf16.mxu0 0
    %65 = vmatpush1.bf16.msra.mxu0 0
    %66 = vmatprep.subr.bf16.mxu0 0
    %67 = vmatpush1.bf16.msra.mxu0 0
    %68 = vmatprep.subr.bf16.mxu0 0
    %69 = vmatpush1.bf16.msra.mxu0 0
    %70 = vmatprep.subr.bf16.mxu0 0
    %71 = vmatpush1.bf16.msra.mxu0 0
    %72 = vmatprep.subr.bf16.mxu0 0
    %73 = vmatpush1.bf16.msra.mxu0 0
    %74 = vmatprep.subr.bf16.mxu0 0
    %75 = vmatpush1.bf16.msra.mxu0 0
    %76 = vmatprep.subr.bf16.mxu0 0
    %77 = vmatpush1.bf16.msra.mxu0 0
    %78 = vmatprep.subr.bf16.mxu0 0
    %79 = vmatpush1.bf16.msra.mxu0 0
    %80 = vmatprep.subr.bf16.mxu0 0
    %81 = vmatpush1.bf16.msra.mxu0 0
    %82 = vmatprep.subr.bf16.mxu0 0
    %83 = vmatpush1.bf16.msra.mxu0 0
    %84 = vmatprep.subr.bf16.mxu0 0
    %85 = vmatpush1.bf16.msra.mxu0 0
    %86 = vmatprep.subr.bf16.mxu0 0
    %87 = vmatpush1.bf16.msra.mxu0 0
    %88 = vmatprep.subr.bf16.mxu0 0
    %89 = vmatpush1.bf16.msra.mxu0 0
    %90 = vmatprep.subr.bf16.mxu0 0
    %91 = vmatpush1.bf16.msra.mxu0 0
    %92 = vmatprep.mubr.bf16.mxu0 0
    %93 = vmatmul.mubr.bf16.gmra.mrb[0].mxu0 %v58
    %v94 = vpop.f32.mrb[0].mxu0
    %v95 = vadd.f32 0.0, %v94
    %v96 = vpop.f32.mrb[0].mxu0
    %v97 = vpop.f32.mrb[0].mxu0
    %v98 = vadd.f32 0.0, %v97
    %v99 = vpop.f32.mrb[0].mxu0
    %100 = vdwg.mxu0
    %v101 = vpack.c.bf16 %v95, %v95
    %v102 = vpack.c.bf16 %v98, %v98
    %104 = vrot.lane.b32.xlu0 %v101, 96
    %v105 = vpop.permute.xlu0 %104
    %v107 = vsel %vm56, %v101, 0
    %v110 = vsel %vm56, %v105, 0
    %112 = vmatprep.subr.bf16.mxu0 0
    %113 = vmatpush1.bf16.xpose.msra.mxu0 %v110
    %114 = vmatprep.subr.bf16.mxu0 0
    %115 = vmatpush1.bf16.xpose.msra.mxu0 0
    %116 = vmatprep.subr.bf16.mxu0 0
    %117 = vmatpush1.bf16.xpose.msra.mxu0 0
    %118 = vmatprep.subr.bf16.mxu0 0
    %119 = vmatpush1.bf16.xpose.msra.mxu0 0
    %120 = vmatprep.subr.bf16.mxu0 0
    %121 = vmatpush1.bf16.xpose.msra.mxu0 0
    %122 = vmatprep.subr.bf16.mxu0 0
    %123 = vmatpush1.bf16.xpose.msra.mxu0 0
    %124 = vmatprep.subr.bf16.mxu0 0
    %125 = vmatpush1.bf16.xpose.msra.mxu0 0
    %126 = vmatprep.subr.bf16.mxu0 0
    %127 = vmatpush1.bf16.xpose.msra.mxu0 0
    %128 = vmatprep.subr.bf16.mxu0 0
    %129 = vmatpush1.bf16.xpose.msra.mxu0 0
    %130 = vmatprep.subr.bf16.mxu0 0
    %131 = vmatpush1.bf16.xpose.msra.mxu0 0
    %132 = vmatprep.subr.bf16.mxu0 0
    %133 = vmatpush1.bf16.xpose.msra.mxu0 0
    %134 = vmatprep.subr.bf16.mxu0 0
    %135 = vmatpush1.bf16.xpose.msra.mxu0 0
    %136 = vmatprep.subr.bf16.mxu0 0
    %137 = vmatpush1.bf16.xpose.msra.mxu0 0
    %138 = vmatprep.subr.bf16.mxu0 0
    %139 = vmatpush1.bf16.xpose.msra.mxu0 0
    %140 = vmatprep.subr.bf16.mxu0 0
    %141 = vmatpush1.bf16.xpose.msra.mxu0 0
    %142 = vmatprep.subr.bf16.mxu0 0
    %143 = vmatpush1.bf16.xpose.msra.mxu0 0
    %144 = vmatprep.mubr.bf16.mxu0 0
    %145 = vmatmul.mubr.bf16.gmra.mrb[0].mxu0 %v107
    %v146 = vpop.f32.mrb[0].mxu0
    %v147 = vadd.f32 0.0, %v146
    %v148 = vpop.f32.mrb[0].mxu0
    %v149 = vpop.f32.mrb[0].mxu0
    %v150 = vpop.f32.mrb[0].mxu0
    %151 = vdwg.mxu0
    %153 = vrot.lane.b32.xlu0 %v102, 96
    %v154 = vpop.permute.xlu0 %153
    %v156 = vsel %vm56, %v102, 0
    %v159 = vsel %vm56, %v154, 0
    %161 = vmatprep.subr.bf16.mxu0 0
    %162 = vmatpush1.bf16.xpose.msra.mxu0 %v159
    %163 = vmatprep.subr.bf16.mxu0 0
    %164 = vmatpush1.bf16.xpose.msra.mxu0 0
    %165 = vmatprep.subr.bf16.mxu0 0
    %166 = vmatpush1.bf16.xpose.msra.mxu0 0
    %167 = vmatprep.subr.bf16.mxu0 0
    %168 = vmatpush1.bf16.xpose.msra.mxu0 0
    %169 = vmatprep.subr.bf16.mxu0 0
    %170 = vmatpush1.bf16.xpose.msra.mxu0 0
    %171 = vmatprep.subr.bf16.mxu0 0
    %172 = vmatpush1.bf16.xpose.msra.mxu0 0
    %173 = vmatprep.subr.bf16.mxu0 0
    %174 = vmatpush1.bf16.xpose.msra.mxu0 0
    %175 = vmatprep.subr.bf16.mxu0 0
    %176 = vmatpush1.bf16.xpose.msra.mxu0 0
    %177 = vmatprep.subr.bf16.mxu0 0
    %178 = vmatpush1.bf16.xpose.msra.mxu0 0
    %179 = vmatprep.subr.bf16.mxu0 0
    %180 = vmatpush1.bf16.xpose.msra.mxu0 0
    %181 = vmatprep.subr.bf16.mxu0 0
    %182 = vmatpush1.bf16.xpose.msra.mxu0 0
    %183 = vmatprep.subr.bf16.mxu0 0
    %184 = vmatpush1.bf16.xpose.msra.mxu0 0
    %185 = vmatprep.subr.bf16.mxu0 0
    %186 = vmatpush1.bf16.xpose.msra.mxu0 0
    %187 = vmatprep.subr.bf16.mxu0 0
    %188 = vmatpush1.bf16.xpose.msra.mxu0 0
    %189 = vmatprep.subr.bf16.mxu0 0
    %190 = vmatpush1.bf16.xpose.msra.mxu0 0
    %191 = vmatprep.subr.bf16.mxu0 0
    %192 = vmatpush1.bf16.xpose.msra.mxu0 0
    %193 = vmatprep.mubr.bf16.mxu0 0
    %194 = vmatmul.mubr.bf16.gmra.mrb[0].mxu0 %v156
    %v195 = vpop.f32.mrb[0].mxu0
    %v196 = vadd.f32 0.0, %v195
    %v197 = vpop.f32.mrb[0].mxu0
    %v198 = vpop.f32.mrb[0].mxu0
    %v199 = vpop.f32.mrb[0].mxu0
    %200 = vdwg.mxu0
    %v201 = vmul.f32 %v147, 0.17677669
    %v202 = vmul.f32 %v196, 0.17677669
    %v203 = vsel %vm35, 1, 0
    %v204 = vsel %vm36, 1, 0
    %v205 = vlaneseq
    %v206 = vshrl.u32 %v205, 7
    %v207 = vsub.s32 0, %v206
    %v208 = vrot.slane %v203, %v207
    %v209 = vlaneseq
    %v210 = vshrl.u32 %v209, 7
    %v211 = vsub.s32 0, %v210
    %v212 = vrot.slane %v204, %v211
    %vm213 = vcmp.eq.s32.totalorder %v208, 1
    %vm214 = vcmp.eq.s32.totalorder %v212, 1
    %v215 = vsel %vm213, %v201, -1e+09
    %v216 = vsel %vm214, %v202, -1e+09
    %vm217 = vcmask 64512
    %v218 = vsel %vm217, %v215, -inf
    %219 = vmax.xlane.f32.xlu0 %v218
    %v220 = vpop.xlane.xlu0 %219
    %v221 = vsel %vm217, %v216, -inf
    %222 = vmax.xlane.f32.xlu0 %v221
    %v223 = vpop.xlane.xlu0 %222
    %v224 = vsub.f32 %v215, %v220
    %v225 = vsub.f32 %v216, %v223
    %v226 = vmul.f32 %v224, 1.442695
    %v227 = vpow.pop %v226
    %v228 = vmul.f32 %v225, 1.442695
    %v229 = vpow.pop %v228
    %v230 = vsel %vm217, %v227, 0.0
    %231 = vadd.xlane.f32.xlu0 %v230
    %v232 = vpop.xlane.xlu0 %231
    %v233 = vsel %vm217, %v229, 0.0
    %234 = vadd.xlane.f32.xlu0 %v233
    %v235 = vpop.xlane.xlu0 %234
    %v236 = vrcp.pop %v232
    %v237 = vrcp.pop %v235
    %v238 = vmul.f32 %v227, %v236
    %v239 = vmul.f32 %v229, %v237
    %v240 = vpack.c.bf16 %v238, %v238
    %v241 = vpack.c.bf16 %v239, %v239
    %242 = vrot.lane.b32.xlu0 %v101, 64
    %v243 = vpop.permute.xlu0 %242
    %v245 = vsel %vm217, %v240, 0
    %vm247 = vcmask 1043456
    %v249 = vsel %vm247, %v243, 0
    %251 = vmatprep.subr.bf16.mxu0 0
    %252 = vmatpush1.bf16.msra.mxu0 %v249
    %253 = vmatprep.subr.bf16.mxu0 0
    %254 = vmatpush1.bf16.msra.mxu0 0
    %255 = vmatprep.subr.bf16.mxu0 0
    %256 = vmatpush1.bf16.msra.mxu0 0
    %257 = vmatprep.subr.bf16.mxu0 0
    %258 = vmatpush1.bf16.msra.mxu0 0
    %259 = vmatprep.subr.bf16.mxu0 0
    %260 = vmatpush1.bf16.msra.mxu0 0
    %261 = vmatprep.subr.bf16.mxu0 0
    %262 = vmatpush1.bf16.msra.mxu0 0
    %263 = vmatprep.subr.bf16.mxu0 0
    %264 = vmatpush1.bf16.msra.mxu0 0
    %265 = vmatprep.subr.bf16.mxu0 0
    %266 = vmatpush1.bf16.msra.mxu0 0
    %267 = vmatprep.subr.bf16.mxu0 0
    %268 = vmatpush1.bf16.msra.mxu0 0
    %269 = vmatprep.subr.bf16.mxu0 0
    %270 = vmatpush1.bf16.msra.mxu0 0
    %271 = vmatprep.subr.bf16.mxu0 0
    %272 = vmatpush1.bf16.msra.mxu0 0
    %273 = vmatprep.subr.bf16.mxu0 0
    %274 = vmatpush1.bf16.msra.mxu0 0
    %275 = vmatprep.subr.bf16.mxu0 0
    %276 = vmatpush1.bf16.msra.mxu0 0
    %277 = vmatprep.subr.bf16.mxu0 0
    %278 = vmatpush1.bf16.msra.mxu0 0
    %279 = vmatprep.subr.bf16.mxu0 0
    %280 = vmatpush1.bf16.msra.mxu0 0
    %281 = vmatprep.subr.bf16.mxu0 0
    %282 = vmatpush1.bf16.msra.mxu0 0
    %283 = vmatprep.mubr.bf16.mxu0 0
    %284 = vmatmul.mubr.bf16.gmra.mrb[0].mxu0 %v245
    %v285 = vpop.f32.mrb[0].mxu0
    %v286 = vadd.f32 0.0, %v285
    %v287 = vpop.f32.mrb[0].mxu0
    %v288 = vpop.f32.mrb[0].mxu0
    %v289 = vpop.f32.mrb[0].mxu0
    %290 = vdwg.mxu0
    %291 = vrot.lane.b32.xlu0 %v102, 64
    %v292 = vpop.permute.xlu0 %291
    %v294 = vsel %vm217, %v241, 0
    %v297 = vsel %vm247, %v292, 0
    %299 = vmatprep.subr.bf16.mxu0 0
    %300 = vmatpush1.bf16.msra.mxu0 %v297
    %301 = vmatprep.subr.bf16.mxu0 0
    %302 = vmatpush1.bf16.msra.mxu0 0
    %303 = vmatprep.subr.bf16.mxu0 0
    %304 = vmatpush1.bf16.msra.mxu0 0
    %305 = vmatprep.subr.bf16.mxu0 0
    %306 = vmatpush1.bf16.msra.mxu0 0
    %307 = vmatprep.subr.bf16.mxu0 0
    %308 = vmatpush1.bf16.msra.mxu0 0
    %309 = vmatprep.subr.bf16.mxu0 0
    %310 = vmatpush1.bf16.msra.mxu0 0
    %311 = vmatprep.subr.bf16.mxu0 0
    %312 = vmatpush1.bf16.msra.mxu0 0
    %313 = vmatprep.subr.bf16.mxu0 0
    %314 = vmatpush1.bf16.msra.mxu0 0
    %315 = vmatprep.subr.bf16.mxu0 0
    %316 = vmatpush1.bf16.msra.mxu0 0
    %317 = vmatprep.subr.bf16.mxu0 0
    %318 = vmatpush1.bf16.msra.mxu0 0
    %319 = vmatprep.subr.bf16.mxu0 0
    %320 = vmatpush1.bf16.msra.mxu0 0
    %321 = vmatprep.subr.bf16.mxu0 0
    %322 = vmatpush1.bf16.msra.mxu0 0
    %323 = vmatprep.subr.bf16.mxu0 0
    %324 = vmatpush1.bf16.msra.mxu0 0
    %325 = vmatprep.subr.bf16.mxu0 0
    %326 = vmatpush1.bf16.msra.mxu0 0
    %327 = vmatprep.subr.bf16.mxu0 0
    %328 = vmatpush1.bf16.msra.mxu0 0
    %329 = vmatprep.subr.bf16.mxu0 0
    %330 = vmatpush1.bf16.msra.mxu0 0
    %331 = vmatprep.mubr.bf16.mxu0 0
    %332 = vmatmul.mubr.bf16.gmra.mrb[0].mxu0 %v294
    %v333 = vpop.f32.mrb[0].mxu0
    %v334 = vadd.f32 0.0, %v333
    %v335 = vpop.f32.mrb[0].mxu0
    %v336 = vpop.f32.mrb[0].mxu0
    %v337 = vpop.f32.mrb[0].mxu0
    %338 = vdwg.mxu0
    %v339 = vpack.c.bf16 %v334, %v286
    %v340 = vld [vmem:[%s4 + $0x4] sm:$0xf]
    %v341 = vld [vmem:[%s4 + $0x34] sm:$0xf]
    %v342 = vld [vmem:[%s4 + $0x64] sm:$0xf]
    %v343 = vld [vmem:[%s4 + $0x94] sm:$0xf]
    %v348 = vunpack.c.l.b16 %v340
    %v349 = vunpack.c.l.b16 %v341
    %v350 = vunpack.c.l.b16 %v342
    %v351 = vunpack.c.l.b16 %v343
    %v352 = vpack.c.b16 %v349, %v348
    %v353 = vpack.c.b16 %v351, %v350
    %v357 = vsel %vm56, %v339, 0
    %359 = vmatprep.subr.bf16.mxu0 0
    %360 = vmatpush1.bf16.msra.mxu0 %v352
    %361 = vmatprep.subr.bf16.mxu0 0
    %362 = vmatpush1.bf16.msra.mxu0 %v353
    %363 = vmatprep.subr.bf16.mxu0 0
    %364 = vmatpush1.bf16.msra.mxu0 0
    %365 = vmatprep.subr.bf16.mxu0 0
    %366 = vmatpush1.bf16.msra.mxu0 0
    %367 = vmatprep.subr.bf16.mxu0 0
    %368 = vmatpush1.bf16.msra.mxu0 0
    %369 = vmatprep.subr.bf16.mxu0 0
    %370 = vmatpush1.bf16.msra.mxu0 0
    %371 = vmatprep.subr.bf16.mxu0 0
    %372 = vmatpush1.bf16.msra.mxu0 0
    %373 = vmatprep.subr.bf16.mxu0 0
    %374 = vmatpush1.bf16.msra.mxu0 0
    %375 = vmatprep.subr.bf16.mxu0 0
    %376 = vmatpush1.bf16.msra.mxu0 0
    %377 = vmatprep.subr.bf16.mxu0 0
    %378 = vmatpush1.bf16.msra.mxu0 0
    %379 = vmatprep.subr.bf16.mxu0 0
    %380 = vmatpush1.bf16.msra.mxu0 0
    %381 = vmatprep.subr.bf16.mxu0 0
    %382 = vmatpush1.bf16.msra.mxu0 0
    %383 = vmatprep.subr.bf16.mxu0 0
    %384 = vmatpush1.bf16.msra.mxu0 0
    %385 = vmatprep.subr.bf16.mxu0 0
    %386 = vmatpush1.bf16.msra.mxu0 0
    %387 = vmatprep.subr.bf16.mxu0 0
    %388 = vmatpush1.bf16.msra.mxu0 0
    %389 = vmatprep.subr.bf16.mxu0 0
    %390 = vmatpush1.bf16.msra.mxu0 0
    %391 = vmatprep.mubr.bf16.mxu0 0
    %392 = vmatmul.mubr.bf16.gmra.mrb[0].mxu0 %v357
    %v393 = vpop.f32.mrb[0].mxu0
    %v394 = vadd.f32 0.0, %v393
    %v395 = vpop.f32.mrb[0].mxu0
    %v396 = vpop.f32.mrb[0].mxu0
    %v397 = vadd.f32 0.0, %v396
    %v398 = vpop.f32.mrb[0].mxu0
    %399 = vdwg.mxu0
    %v400 = vadd.f32 %v37, %v394
    %v401 = vadd.f32 %v38, %v397
    %v402 = vld [vmem:[%s7 + $0x4] sm:$0x1]
    %v403 = vld [vmem:[%s7 + $0x5] sm:$0x1]
    %v404 = vsel %vm56, %v400, 0.0
    %405 = vadd.xlane.f32.xlu0 %v404
    %v406 = vpop.xlane.xlu0 %405
    %v407 = vsel %vm56, %v401, 0.0
    %408 = vadd.xlane.f32.xlu0 %v407
    %v409 = vpop.xlane.xlu0 %408
    %v410 = vrcp.pop 32.0
    %v411 = vmul.f32 %v406, %v410
    %v412 = vmul.f32 %v409, %v410
    %v413 = vsub.f32 %v400, %v411
    %v414 = vsub.f32 %v401, %v412
    %v415 = vmul.f32 %v413, %v413
    %v416 = vmul.f32 %v414, %v414
    %v417 = vsel %vm56, %v415, 0.0
    %418 = vadd.xlane.f32.xlu0 %v417
    %v419 = vpop.xlane.xlu0 %418
    %v420 = vsel %vm56, %v416, 0.0
    %421 = vadd.xlane.f32.xlu0 %v420
    %v422 = vpop.xlane.xlu0 %421
    %v423 = vmul.f32 %v419, %v410
    %v424 = vmul.f32 %v422, %v410
    %v425 = vadd.f32 %v423, 1e-12
    %v426 = vadd.f32 %v424, 1e-12
    %v427 = vrsqrt.pop %v425
    %v428 = vrsqrt.pop %v426
    %v429 = vmul.f32 %v413, %v427
    %v430 = vmul.f32 %v414, %v428
    %v431 = vlaneseq
    %v432 = vshrl.u32 %v431, 7
    %v433 = vsub.s32 0, %v432
    %v434 = vrot.slane %v402, %v433
    %v435 = vmul.f32 %v429, %v434
    %v436 = vmul.f32 %v430, %v434
    %v437 = vlaneseq
    %v438 = vshrl.u32 %v437, 7
    %v439 = vsub.s32 0, %v438
    %v440 = vrot.slane %v403, %v439
    %v441 = vadd.f32 %v435, %v440
    %v442 = vadd.f32 %v436, %v440
    %v443 = vpack.c.bf16 %v442, %v441
    %v444 = vld [vmem:[%s4 + $0x8] sm:$0xf]
    %v445 = vld [vmem:[%s4 + $0x38] sm:$0xf]
    %v446 = vld [vmem:[%s4 + $0x68] sm:$0xf]
    %v447 = vld [vmem:[%s4 + $0x98] sm:$0xf]
    %v452 = vunpack.c.l.b16 %v444
    %v453 = vunpack.c.l.b16 %v445
    %v454 = vunpack.c.l.b16 %v446
    %v455 = vunpack.c.l.b16 %v447
    %v456 = vpack.c.b16 %v453, %v452
    %v457 = vpack.c.b16 %v455, %v454
    %v461 = vsel %vm56, %v443, 0
    %463 = vmatprep.subr.bf16.mxu0 0
    %464 = vmatpush1.bf16.msra.mxu0 %v456
    %465 = vmatprep.subr.bf16.mxu0 0
    %466 = vmatpush1.bf16.msra.mxu0 %v457
    %467 = vmatprep.subr.bf16.mxu0 0
    %468 = vmatpush1.bf16.msra.mxu0 0
    %469 = vmatprep.subr.bf16.mxu0 0
    %470 = vmatpush1.bf16.msra.mxu0 0
    %471 = vmatprep.subr.bf16.mxu0 0
    %472 = vmatpush1.bf16.msra.mxu0 0
    %473 = vmatprep.subr.bf16.mxu0 0
    %474 = vmatpush1.bf16.msra.mxu0 0
    %475 = vmatprep.subr.bf16.mxu0 0
    %476 = vmatpush1.bf16.msra.mxu0 0
    %477 = vmatprep.subr.bf16.mxu0 0
    %478 = vmatpush1.bf16.msra.mxu0 0
    %479 = vmatprep.subr.bf16.mxu0 0
    %480 = vmatpush1.bf16.msra.mxu0 0
    %481 = vmatprep.subr.bf16.mxu0 0
    %482 = vmatpush1.bf16.msra.mxu0 0
    %483 = vmatprep.subr.bf16.mxu0 0
    %484 = vmatpush1.bf16.msra.mxu0 0
    %485 = vmatprep.subr.bf16.mxu0 0
    %486 = vmatpush1.bf16.msra.mxu0 0
    %487 = vmatprep.subr.bf16.mxu0 0
    %488 = vmatpush1.bf16.msra.mxu0 0
    %489 = vmatprep.subr.bf16.mxu0 0
    %490 = vmatpush1.bf16.msra.mxu0 0
    %491 = vmatprep.subr.bf16.mxu0 0
    %492 = vmatpush1.bf16.msra.mxu0 0
    %493 = vmatprep.subr.bf16.mxu0 0
    %494 = vmatpush1.bf16.msra.mxu0 0
    %495 = vmatprep.mubr.bf16.mxu0 0
    %496 = vmatmul.mubr.bf16.gmra.mrb[0].mxu0 %v461
    %v497 = vpop.f32.mrb[0].mxu0
    %v498 = vadd.f32 0.0, %v497
    %v499 = vpop.f32.mrb[0].mxu0
    %v500 = vpop.f32.mrb[0].mxu0
    %v501 = vadd.f32 0.0, %v500
    %v502 = vpop.f32.mrb[0].mxu0
    %503 = vdwg.mxu0
    %v504 = vld [vmem:[%s7] sm:$0x1]
    %v505 = vlaneseq
    %v506 = vshrl.u32 %v505, 7
    %v507 = vsub.s32 0, %v506
    %v508 = vrot.slane %v504, %v507
    %v509 = vadd.f32 %v498, %v508
    %v510 = vadd.f32 %v501, %v508
    %v511 = vmul.f32 %v509, %v509
    %v512 = vmul.f32 %v510, %v510
    %v513 = vmul.f32 %v509, %v511
    %v514 = vmul.f32 %v510, %v512
    %v515 = vmul.f32 %v513, 0.044715
    %v516 = vmul.f32 %v514, 0.044715
    %v517 = vadd.f32 %v509, %v515
    %v518 = vadd.f32 %v510, %v516
    %v519 = vmul.f32 %v517, 0.7978846
    %v520 = vmul.f32 %v518, 0.7978846
    %v521 = vtanh.pop %v519
    %v522 = vtanh.pop %v520
    %v523 = vadd.f32 %v521, 1.0
    %v524 = vadd.f32 %v522, 1.0
    %v525 = vmul.f32 %v523, 0.5
    %v526 = vmul.f32 %v524, 0.5
    %v527 = vmul.f32 %v509, %v525
    %v528 = vmul.f32 %v510, %v526
    %v529 = vpack.c.bf16 %v528, %v527
    %v530 = vld [vmem:[%s5] sm:$0xf]
    %v531 = vld [vmem:[%s5 + $0x8] sm:$0xf]
    %v532 = vld [vmem:[%s5 + $0x10] sm:$0xf]
    %v533 = vld [vmem:[%s5 + $0x18] sm:$0xf]
    %v534 = vld [vmem:[%s5 + $0x20] sm:$0xf]
    %v535 = vld [vmem:[%s5 + $0x28] sm:$0xf]
    %v536 = vld [vmem:[%s5 + $0x30] sm:$0xf]
    %v537 = vld [vmem:[%s5 + $0x38] sm:$0xf]
    %v546 = vunpack.c.l.b16 %v530
    %v547 = vunpack.c.l.b16 %v531
    %v548 = vunpack.c.l.b16 %v532
    %v549 = vunpack.c.l.b16 %v533
    %v550 = vunpack.c.l.b16 %v534
    %v551 = vunpack.c.l.b16 %v535
    %v552 = vunpack.c.l.b16 %v536
    %v553 = vunpack.c.l.b16 %v537
    %v554 = vpack.c.b16 %v547, %v546
    %v555 = vpack.c.b16 %v549, %v548
    %v556 = vpack.c.b16 %v551, %v550
    %v557 = vpack.c.b16 %v553, %v552
    %vm562 = vcmask 523264
    %v564 = vsel %vm562, %v529, 0
    %566 = vmatprep.subr.bf16.mxu0 0
    %567 = vmatpush1.bf16.msra.mxu0 %v554
    %568 = vmatprep.subr.bf16.mxu0 0
    %569 = vmatpush1.bf16.msra.mxu0 %v555
    %570 = vmatprep.subr.bf16.mxu0 0
    %571 = vmatpush1.bf16.msra.mxu0 %v556
    %572 = vmatprep.subr.bf16.mxu0 0
    %573 = vmatpush1.bf16.msra.mxu0 %v557
    %574 = vmatprep.subr.bf16.mxu0 0
    %575 = vmatpush1.bf16.msra.mxu0 0
    %576 = vmatprep.subr.bf16.mxu0 0
    %577 = vmatpush1.bf16.msra.mxu0 0
    %578 = vmatprep.subr.bf16.mxu0 0
    %579 = vmatpush1.bf16.msra.mxu0 0
    %580 = vmatprep.subr.bf16.mxu0 0
    %581 = vmatpush1.bf16.msra.mxu0 0
    %582 = vmatprep.subr.bf16.mxu0 0
    %583 = vmatpush1.bf16.msra.mxu0 0
    %584 = vmatprep.subr.bf16.mxu0 0
    %585 = vmatpush1.bf16.msra.mxu0 0
    %586 = vmatprep.subr.bf16.mxu0 0
    %587 = vmatpush1.bf16.msra.mxu0 0
    %588 = vmatprep.subr.bf16.mxu0 0
    %589 = vmatpush1.bf16.msra.mxu0 0
    %590 = vmatprep.subr.bf16.mxu0 0
    %591 = vmatpush1.bf16.msra.mxu0 0
    %592 = vmatprep.subr.bf16.mxu0 0
    %593 = vmatpush1.bf16.msra.mxu0 0
    %594 = vmatprep.subr.bf16.mxu0 0
    %595 = vmatpush1.bf16.msra.mxu0 0
    %596 = vmatprep.subr.bf16.mxu0 0
    %597 = vmatpush1.bf16.msra.mxu0 0
    %598 = vmatprep.mubr.bf16.mxu0 0
    %599 = vmatmul.mubr.bf16.gmra.mrb[0].mxu0 %v564
    %v600 = vpop.f32.mrb[0].mxu0
    %v601 = vadd.f32 0.0, %v600
    %v602 = vpop.f32.mrb[0].mxu0
    %v603 = vpop.f32.mrb[0].mxu0
    %v604 = vadd.f32 0.0, %v603
    %v605 = vpop.f32.mrb[0].mxu0
    %606 = vdwg.mxu0
    %v607 = vld [vmem:[%s7 + $0x1] sm:$0x1]
    %v608 = vlaneseq
    %v609 = vshrl.u32 %v608, 7
    %v610 = vsub.s32 0, %v609
    %v611 = vrot.slane %v607, %v610
    %v612 = vadd.f32 %v601, %v611
    %v613 = vadd.f32 %v604, %v611
    %v614 = vadd.f32 %v441, %v612
    %v615 = vadd.f32 %v442, %v613
    %v616 = vld [vmem:[%s7 + $0x6] sm:$0x1]
    %v617 = vld [vmem:[%s7 + $0x7] sm:$0x1]
    %v618 = vsel %vm56, %v614, 0.0
    %619 = vadd.xlane.f32.xlu0 %v618
    %v620 = vpop.xlane.xlu0 %619
    %v621 = vsel %vm56, %v615, 0.0
    %622 = vadd.xlane.f32.xlu0 %v621
    %v623 = vpop.xlane.xlu0 %622
    %v624 = vmul.f32 %v620, %v410
    %v625 = vmul.f32 %v623, %v410
    %v626 = vsub.f32 %v614, %v624
    %v627 = vsub.f32 %v615, %v625
    %v628 = vmul.f32 %v626, %v626
    %v629 = vmul.f32 %v627, %v627
    %v630 = vsel %vm56, %v628, 0.0
    %631 = vadd.xlane.f32.xlu0 %v630
    %v632 = vpop.xlane.xlu0 %631
    %v633 = vsel %vm56, %v629, 0.0
    %634 = vadd.xlane.f32.xlu0 %v633
    %v635 = vpop.xlane.xlu0 %634
    %v636 = vmul.f32 %v632, %v410
    %v637 = vmul.f32 %v635, %v410
    %v638 = vadd.f32 %v636, 1e-12
    %v639 = vadd.f32 %v637, 1e-12
    %v640 = vrsqrt.pop %v638
    %v641 = vrsqrt.pop %v639
    %v642 = vmul.f32 %v626, %v640
    %v643 = vmul.f32 %v627, %v641
    %v644 = vlaneseq
    %v645 = vshrl.u32 %v644, 7
    %v646 = vsub.s32 0, %v645
    %v647 = vrot.slane %v616, %v646
    %v648 = vmul.f32 %v642, %v647
    %v649 = vmul.f32 %v643, %v647
    %v650 = vlaneseq
    %v651 = vshrl.u32 %v650, 7
    %v652 = vsub.s32 0, %v651
    %v653 = vrot.slane %v617, %v652
    %v654 = vadd.f32 %v648, %v653
    %v655 = vadd.f32 %v649, %v653
    %v656 = vld [vmem:[%s3] sm:$0xf]
    %v657 = vpack.c.bf16 %v656, %v656
    %v658 = vld [vmem:[%s4 + $0xc] sm:$0xf]
    %v659 = vld [vmem:[%s4 + $0x3c] sm:$0xf]
    %v660 = vld [vmem:[%s4 + $0x6c] sm:$0xf]
    %v661 = vld [vmem:[%s4 + $0x9c] sm:$0xf]
    %v666 = vunpack.c.l.b16 %v658
    %v667 = vunpack.c.l.b16 %v659
    %v668 = vunpack.c.l.b16 %v660
    %v669 = vunpack.c.l.b16 %v661
    %v670 = vpack.c.b16 %v667, %v666
    %v671 = vpack.c.b16 %v669, %v668
    %v675 = vsel %vm56, %v657, 0
    %677 = vmatprep.subr.bf16.mxu0 0
    %678 = vmatpush1.bf16.msra.mxu0 %v670
    %679 = vmatprep.subr.bf16.mxu0 0
    %680 = vmatpush1.bf16.msra.mxu0 %v671
    %681 = vmatprep.subr.bf16.mxu0 0
    %682 = vmatpush1.bf16.msra.mxu0 0
    %683 = vmatprep.subr.bf16.mxu0 0
    %684 = vmatpush1.bf16.msra.mxu0 0
    %685 = vmatprep.subr.bf16.mxu0 0
    %686 = vmatpush1.bf16.msra.mxu0 0
    %687 = vmatprep.subr.bf16.mxu0 0
    %688 = vmatpush1.bf16.msra.mxu0 0
    %689 = vmatprep.subr.bf16.mxu0 0
    %690 = vmatpush1.bf16.msra.mxu0 0
    %691 = vmatprep.subr.bf16.mxu0 0
    %692 = vmatpush1.bf16.msra.mxu0 0
    %693 = vmatprep.subr.bf16.mxu0 0
    %694 = vmatpush1.bf16.msra.mxu0 0
    %695 = vmatprep.subr.bf16.mxu0 0
    %696 = vmatpush1.bf16.msra.mxu0 0
    %697 = vmatprep.subr.bf16.mxu0 0
    %698 = vmatpush1.bf16.msra.mxu0 0
    %699 = vmatprep.subr.bf16.mxu0 0
    %700 = vmatpush1.bf16.msra.mxu0 0
    %701 = vmatprep.subr.bf16.mxu0 0
    %702 = vmatpush1.bf16.msra.mxu0 0
    %703 = vmatprep.subr.bf16.mxu0 0
    %704 = vmatpush1.bf16.msra.mxu0 0
    %705 = vmatprep.subr.bf16.mxu0 0
    %706 = vmatpush1.bf16.msra.mxu0 0
    %707 = vmatprep.subr.bf16.mxu0 0
    %708 = vmatpush1.bf16.msra.mxu0 0
    %709 = vmatprep.mubr.bf16.mxu0 0
    %710 = vmatmul.mubr.bf16.gmra.mrb[0].mxu0 %v675
    %v711 = vpop.f32.mrb[0].mxu0
    %v712 = vadd.f32 0.0, %v711
    %v713 = vpop.f32.mrb[0].mxu0
    %v714 = vpop.f32.mrb[0].mxu0
    %v715 = vpop.f32.mrb[0].mxu0
    %716 = vdwg.mxu0
    %v717 = vpack.c.bf16 %v712, %v712
    %719 = vrot.lane.b32.xlu0 %v717, 96
    %v720 = vpop.permute.xlu0 %719
    %v722 = vsel %vm56, %v717, 0
    %v725 = vsel %vm56, %v720, 0
    %727 = vmatprep.subr.bf16.mxu0 0
    %728 = vmatpush1.bf16.xpose.msra.mxu0 %v725
    %729 = vmatprep.subr.bf16.mxu0 0
    %730 = vmatpush1.bf16.xpose.msra.mxu0 0
    %731 = vmatprep.subr.bf16.mxu0 0
    %732 = vmatpush1.bf16.xpose.msra.mxu0 0
    %733 = vmatprep.subr.bf16.mxu0 0
    %734 = vmatpush1.bf16.xpose.msra.mxu0 0
    %735 = vmatprep.subr.bf16.mxu0 0
    %736 = vmatpush1.bf16.xpose.msra.mxu0 0
    %737 = vmatprep.subr.bf16.mxu0 0
    %738 = vmatpush1.bf16.xpose.msra.mxu0 0
    %739 = vmatprep.subr.bf16.mxu0 0
    %740 = vmatpush1.bf16.xpose.msra.mxu0 0
    %741 = vmatprep.subr.bf16.mxu0 0
    %742 = vmatpush1.bf16.xpose.msra.mxu0 0
    %743 = vmatprep.subr.bf16.mxu0 0
    %744 = vmatpush1.bf16.xpose.msra.mxu0 0
    %745 = vmatprep.subr.bf16.mxu0 0
    %746 = vmatpush1.bf16.xpose.msra.mxu0 0
    %747 = vmatprep.subr.bf16.mxu0 0
    %748 = vmatpush1.bf16.xpose.msra.mxu0 0
    %749 = vmatprep.subr.bf16.mxu0 0
    %750 = vmatpush1.bf16.xpose.msra.mxu0 0
    %751 = vmatprep.subr.bf16.mxu0 0
    %752 = vmatpush1.bf16.xpose.msra.mxu0 0
    %753 = vmatprep.subr.bf16.mxu0 0
    %754 = vmatpush1.bf16.xpose.msra.mxu0 0
    %755 = vmatprep.subr.bf16.mxu0 0
    %756 = vmatpush1.bf16.xpose.msra.mxu0 0
    %757 = vmatprep.subr.bf16.mxu0 0
    %758 = vmatpush1.bf16.xpose.msra.mxu0 0
    %759 = vmatprep.mubr.bf16.mxu0 0
    %760 = vmatmul.mubr.bf16.gmra.mrb[0].mxu0 %v722
    %v761 = vpop.f32.mrb[0].mxu0
    %v762 = vadd.f32 0.0, %v761
    %v763 = vpop.f32.mrb[0].mxu0
    %v764 = vpop.f32.mrb[0].mxu0
    %v765 = vpop.f32.mrb[0].mxu0
    %766 = vdwg.mxu0
    %v767 = vmul.f32 %v762, 0.17677669
    %vm768 = vcmask 27648
    %v769 = vsel %vm768, %v767, -inf
    %770 = vmax.xlane.f32.xlu0 %v769
    %v771 = vpop.xlane.xlu0 %770
    %v772 = vsub.f32 %v767, %v771
    %v773 = vmul.f32 %v772, 1.442695
    %v774 = vpow.pop %v773
    %v775 = vsel %vm768, %v774, 0.0
    %776 = vadd.xlane.f32.xlu0 %v775
    %v777 = vpop.xlane.xlu0 %776
    %v778 = vrcp.pop %v777
    %v779 = vmul.f32 %v774, %v778
    %v780 = vpack.c.bf16 %v779, %v779
    %781 = vrot.lane.b32.xlu0 %v717, 64
    %v782 = vpop.permute.xlu0 %781
    %vm783 = vcmask 31744
    %v785 = vsel %vm783, %v780, 0
    %vm787 = vcmask 1041408
    %v789 = vsel %vm787, %v782, 0
    %791 = vmatprep.subr.bf16.mxu0 0
    %792 = vmatpush1.bf16.msra.mxu0 %v789
    %793 = vmatprep.subr.bf16.mxu0 0
    %794 = vmatpush1.bf16.msra.mxu0 0
    %795 = vmatprep.subr.bf16.mxu0 0
    %796 = vmatpush1.bf16.msra.mxu0 0
    %797 = vmatprep.subr.bf16.mxu0 0
    %798 = vmatpush1.bf16.msra.mxu0 0
    %799 = vmatprep.subr.bf16.mxu0 0
    %800 = vmatpush1.bf16.msra.mxu0 0
    %801 = vmatprep.subr.bf16.mxu0 0
    %802 = vmatpush1.bf16.msra.mxu0 0
    %803 = vmatprep.subr.bf16.mxu0 0
    %804 = vmatpush1.bf16.msra.mxu0 0
    %805 = vmatprep.subr.bf16.mxu0 0
    %806 = vmatpush1.bf16.msra.mxu0 0
    %807 = vmatprep.subr.bf16.mxu0 0
    %808 = vmatpush1.bf16.msra.mxu0 0
    %809 = vmatprep.subr.bf16.mxu0 0
    %810 = vmatpush1.bf16.msra.mxu0 0
    %811 = vmatprep.subr.bf16.mxu0 0
    %812 = vmatpush1.bf16.msra.mxu0 0
    %813 = vmatprep.subr.bf16.mxu0 0
    %814 = vmatpush1.bf16.msra.mxu0 0
    %815 = vmatprep.subr.bf16.mxu0 0
    %816 = vmatpush1.bf16.msra.mxu0 0
    %817 = vmatprep.subr.bf16.mxu0 0
    %818 = vmatpush1.bf16.msra.mxu0 0
    %819 = vmatprep.subr.bf16.mxu0 0
    %820 = vmatpush1.bf16.msra.mxu0 0
    %821 = vmatprep.subr.bf16.mxu0 0
    %822 = vmatpush1.bf16.msra.mxu0 0
    %823 = vmatprep.mubr.bf16.mxu0 0
    %824 = vmatmul.mubr.bf16.gmra.mrb[0].mxu0 %v785
    %v825 = vpop.f32.mrb[0].mxu0
    %v826 = vadd.f32 0.0, %v825
    %v827 = vpop.f32.mrb[0].mxu0
    %v828 = vpop.f32.mrb[0].mxu0
    %v829 = vpop.f32.mrb[0].mxu0
    %830 = vdwg.mxu0
    %v831 = vpack.c.bf16 %v826, %v826
    %v832 = vld [vmem:[%s4 + $0x10] sm:$0xf]
    %v833 = vld [vmem:[%s4 + $0x40] sm:$0xf]
    %v834 = vld [vmem:[%s4 + $0x70] sm:$0xf]
    %v835 = vld [vmem:[%s4 + $0xa0] sm:$0xf]
    %v840 = vunpack.c.l.b16 %v832
    %v841 = vunpack.c.l.b16 %v833
    %v842 = vunpack.c.l.b16 %v834
    %v843 = vunpack.c.l.b16 %v835
    %v844 = vpack.c.b16 %v841, %v840
    %v845 = vpack.c.b16 %v843, %v842
    %v849 = vsel %vm56, %v831, 0
    %851 = vmatprep.subr.bf16.mxu0 0
    %852 = vmatpush1.bf16.msra.mxu0 %v844
    %853 = vmatprep.subr.bf16.mxu0 0
    %854 = vmatpush1.bf16.msra.mxu0 %v845
    %855 = vmatprep.subr.bf16.mxu0 0
    %856 = vmatpush1.bf16.msra.mxu0 0
    %857 = vmatprep.subr.bf16.mxu0 0
    %858 = vmatpush1.bf16.msra.mxu0 0
    %859 = vmatprep.subr.bf16.mxu0 0
    %860 = vmatpush1.bf16.msra.mxu0 0
    %861 = vmatprep.subr.bf16.mxu0 0
    %862 = vmatpush1.bf16.msra.mxu0 0
    %863 = vmatprep.subr.bf16.mxu0 0
    %864 = vmatpush1.bf16.msra.mxu0 0
    %865 = vmatprep.subr.bf16.mxu0 0
    %866 = vmatpush1.bf16.msra.mxu0 0
    %867 = vmatprep.subr.bf16.mxu0 0
    %868 = vmatpush1.bf16.msra.mxu0 0
    %869 = vmatprep.subr.bf16.mxu0 0
    %870 = vmatpush1.bf16.msra.mxu0 0
    %871 = vmatprep.subr.bf16.mxu0 0
    %872 = vmatpush1.bf16.msra.mxu0 0
    %873 = vmatprep.subr.bf16.mxu0 0
    %874 = vmatpush1.bf16.msra.mxu0 0
    %875 = vmatprep.subr.bf16.mxu0 0
    %876 = vmatpush1.bf16.msra.mxu0 0
    %877 = vmatprep.subr.bf16.mxu0 0
    %878 = vmatpush1.bf16.msra.mxu0 0
    %879 = vmatprep.subr.bf16.mxu0 0
    %880 = vmatpush1.bf16.msra.mxu0 0
    %881 = vmatprep.subr.bf16.mxu0 0
    %882 = vmatpush1.bf16.msra.mxu0 0
    %883 = vmatprep.mubr.bf16.mxu0 0
    %884 = vmatmul.mubr.bf16.gmra.mrb[0].mxu0 %v849
    %v885 = vpop.f32.mrb[0].mxu0
    %v886 = vadd.f32 0.0, %v885
    %v887 = vpop.f32.mrb[0].mxu0
    %v888 = vpop.f32.mrb[0].mxu0
    %v889 = vpop.f32.mrb[0].mxu0
    %890 = vdwg.mxu0
    %v891 = vadd.f32 %v656, %v886
    %v892 = vld [vmem:[%s7 + $0x8] sm:$0x1]
    %v893 = vld [vmem:[%s7 + $0x9] sm:$0x1]
    %vm894 = vcmask 257024
    %v895 = vsel %vm894, %v891, 0.0
    %896 = vadd.xlane.f32.xlu0 %v895
    %v897 = vpop.xlane.xlu0 %896
    %v898 = vmul.f32 %v897, %v410
    %v899 = vsub.f32 %v891, %v898
    %v900 = vmul.f32 %v899, %v899
    %v901 = vsel %vm894, %v900, 0.0
    %902 = vadd.xlane.f32.xlu0 %v901
    %v903 = vpop.xlane.xlu0 %902
    %v904 = vmul.f32 %v903, %v410
    %v905 = vadd.f32 %v904, 1e-12
    %v906 = vrsqrt.pop %v905
    %v907 = vmul.f32 %v899, %v906
    %v908 = vlaneseq
    %v909 = vshrl.u32 %v908, 7
    %v910 = vsub.s32 0, %v909
    %v911 = vrot.slane %v892, %v910
    %v912 = vmul.f32 %v907, %v911
    %v913 = vlaneseq
    %v914 = vshrl.u32 %v913, 7
    %v915 = vsub.s32 0, %v914
    %v916 = vrot.slane %v893, %v915
    %v917 = vadd.f32 %v912, %v916
    %v918 = vpack.c.bf16 %v917, %v917
    %v919 = vld [vmem:[%s4 + $0x14] sm:$0xf]
    %v920 = vld [vmem:[%s4 + $0x44] sm:$0xf]
    %v921 = vld [vmem:[%s4 + $0x74] sm:$0xf]
    %v922 = vld [vmem:[%s4 + $0xa4] sm:$0xf]
    %v927 = vunpack.c.l.b16 %v919
    %v928 = vunpack.c.l.b16 %v920
    %v929 = vunpack.c.l.b16 %v921
    %v930 = vunpack.c.l.b16 %v922
    %v931 = vpack.c.b16 %v928, %v927
    %v932 = vpack.c.b16 %v930, %v929
    %v936 = vsel %vm56, %v918, 0
    %938 = vmatprep.subr.bf16.mxu0 0
    %939 = vmatpush1.bf16.msra.mxu0 %v931
    %940 = vmatprep.subr.bf16.mxu0 0
    %941 = vmatpush1.bf16.msra.mxu0 %v932
    %942 = vmatprep.subr.bf16.mxu0 0
    %943 = vmatpush1.bf16.msra.mxu0 0
    %944 = vmatprep.subr.bf16.mxu0 0
    %945 = vmatpush1.bf16.msra.mxu0 0
    %946 = vmatprep.subr.bf16.mxu0 0
    %947 = vmatpush1.bf16.msra.mxu0 0
    %948 = vmatprep.subr.bf16.mxu0 0
    %949 = vmatpush1.bf16.msra.mxu0 0
    %950 = vmatprep.subr.bf16.mxu0 0
    %951 = vmatpush1.bf16.msra.mxu0 0
    %952 = vmatprep.subr.bf16.mxu0 0
    %953 = vmatpush1.bf16.msra.mxu0 0
    %954 = vmatprep.subr.bf16.mxu0 0
    %955 = vmatpush1.bf16.msra.mxu0 0
    %956 = vmatprep.subr.bf16.mxu0 0
    %957 = vmatpush1.bf16.msra.mxu0 0
    %958 = vmatprep.subr.bf16.mxu0 0
    %959 = vmatpush1.bf16.msra.mxu0 0
    %960 = vmatprep.subr.bf16.mxu0 0
    %961 = vmatpush1.bf16.msra.mxu0 0
    %962 = vmatprep.subr.bf16.mxu0 0
    %963 = vmatpush1.bf16.msra.mxu0 0
    %964 = vmatprep.subr.bf16.mxu0 0
    %965 = vmatpush1.bf16.msra.mxu0 0
    %966 = vmatprep.subr.bf16.mxu0 0
    %967 = vmatpush1.bf16.msra.mxu0 0
    %968 = vmatprep.subr.bf16.mxu0 0
    %969 = vmatpush1.bf16.msra.mxu0 0
    %970 = vmatprep.mubr.bf16.mxu0 0
    %971 = vmatmul.mubr.bf16.gmra.mrb[0].mxu0 %v936
    %v972 = vpop.f32.mrb[0].mxu0
    %v973 = vadd.f32 0.0, %v972
    %v974 = vpop.f32.mrb[0].mxu0
    %v975 = vpop.f32.mrb[0].mxu0
    %v976 = vpop.f32.mrb[0].mxu0
    %977 = vdwg.mxu0
    %v978 = vpack.c.bf16 %v973, %v973
    %v979 = vpack.c.bf16 %v655, %v654
    %v980 = vld [vmem:[%s4 + $0x20] sm:$0xff]
    %v981 = vld [vmem:[%s4 + $0x50] sm:$0xff]
    %v982 = vld [vmem:[%s4 + $0x80] sm:$0xff]
    %v983 = vld [vmem:[%s4 + $0xb0] sm:$0xff]
    %v988 = vunpack.c.l.b16 %v980
    %v989 = vunpack.c.h.b16 %v980
    %v990 = vunpack.c.l.b16 %v981
    %v991 = vunpack.c.h.b16 %v981
    %v992 = vunpack.c.l.b16 %v982
    %v993 = vunpack.c.h.b16 %v982
    %v994 = vunpack.c.l.b16 %v983
    %v995 = vunpack.c.h.b16 %v983
    %v996 = vpack.c.b16 %v990, %v988
    %v997 = vpack.c.b16 %v991, %v989
    %v998 = vpack.c.b16 %v994, %v992
    %v999 = vpack.c.b16 %v995, %v993
    %v1005 = vsel %vm56, %v979, 0
    %1007 = vmatprep.subr.bf16.mxu0 %v997
    %1008 = vmatpush1.bf16.msra.mxu0 %v996
    %1009 = vmatprep.subr.bf16.mxu0 %v999
    %1010 = vmatpush1.bf16.msra.mxu0 %v998
    %1011 = vmatprep.subr.bf16.mxu0 0
    %1012 = vmatpush1.bf16.msra.mxu0 0
    %1013 = vmatprep.subr.bf16.mxu0 0
    %1014 = vmatpush1.bf16.msra.mxu0 0
    %1015 = vmatprep.subr.bf16.mxu0 0
    %1016 = vmatpush1.bf16.msra.mxu0 0
    %1017 = vmatprep.subr.bf16.mxu0 0
    %1018 = vmatpush1.bf16.msra.mxu0 0
    %1019 = vmatprep.subr.bf16.mxu0 0
    %1020 = vmatpush1.bf16.msra.mxu0 0
    %1021 = vmatprep.subr.bf16.mxu0 0
    %1022 = vmatpush1.bf16.msra.mxu0 0
    %1023 = vmatprep.subr.bf16.mxu0 0
    %1024 = vmatpush1.bf16.msra.mxu0 0
    %1025 = vmatprep.subr.bf16.mxu0 0
    %1026 = vmatpush1.bf16.msra.mxu0 0
    %1027 = vmatprep.subr.bf16.mxu0 0
    %1028 = vmatpush1.bf16.msra.mxu0 0
    %1029 = vmatprep.subr.bf16.mxu0 0
    %1030 = vmatpush1.bf16.msra.mxu0 0
    %1031 = vmatprep.subr.bf16.mxu0 0
    %1032 = vmatpush1.bf16.msra.mxu0 0
    %1033 = vmatprep.subr.bf16.mxu0 0
    %1034 = vmatpush1.bf16.msra.mxu0 0
    %1035 = vmatprep.subr.bf16.mxu0 0
    %1036 = vmatpush1.bf16.msra.mxu0 0
    %1037 = vmatprep.subr.bf16.mxu0 0
    %1038 = vmatpush1.bf16.msra.mxu0 0
    %1039 = vmatprep.mubr.bf16.mxu0 0
    %1040 = vmatmul.mubr.bf16.gmra.mrb[0].mxu0 %v1005
    %v1041 = vpop.f32.mrb[0].mxu0
    %v1042 = vadd.f32 0.0, %v1041
    %v1043 = vpop.f32.mrb[0].mxu0
    %v1044 = vadd.f32 0.0, %v1043
    %v1045 = vpop.f32.mrb[0].mxu0
    %v1046 = vadd.f32 0.0, %v1045
    %v1047 = vpop.f32.mrb[0].mxu0
    %v1048 = vadd.f32 0.0, %v1047
    %1049 = vdwg.mxu0
    %v1050 = vpack.c.bf16 %v1042, %v1042
    %v1051 = vpack.c.bf16 %v1046, %v1046
    %v1053 = vsel %vm56, %v978, 0
    %v1056 = vsel %vm56, %v1050, 0
    %1058 = vmatprep.subr.bf16.mxu0 0
    %1059 = vmatpush1.bf16.xpose.msra.mxu0 %v1056
    %1060 = vmatprep.subr.bf16.mxu0 0
    %1061 = vmatpush1.bf16.xpose.msra.mxu0 0
    %1062 = vmatprep.subr.bf16.mxu0 0
    %1063 = vmatpush1.bf16.xpose.msra.mxu0 0
    %1064 = vmatprep.subr.bf16.mxu0 0
    %1065 = vmatpush1.bf16.xpose.msra.mxu0 0
    %1066 = vmatprep.subr.bf16.mxu0 0
    %1067 = vmatpush1.bf16.xpose.msra.mxu0 0
    %1068 = vmatprep.subr.bf16.mxu0 0
    %1069 = vmatpush1.bf16.xpose.msra.mxu0 0
    %1070 = vmatprep.subr.bf16.mxu0 0
    %1071 = vmatpush1.bf16.xpose.msra.mxu0 0
    %1072 = vmatprep.subr.bf16.mxu0 0
    %1073 = vmatpush1.bf16.xpose.msra.mxu0 0
    %1074 = vmatprep.subr.bf16.mxu0 0
    %1075 = vmatpush1.bf16.xpose.msra.mxu0 0
    %1076 = vmatprep.subr.bf16.mxu0 0
    %1077 = vmatpush1.bf16.xpose.msra.mxu0 0
    %1078 = vmatprep.subr.bf16.mxu0 0
    %1079 = vmatpush1.bf16.xpose.msra.mxu0 0
    %1080 = vmatprep.subr.bf16.mxu0 0
    %1081 = vmatpush1.bf16.xpose.msra.mxu0 0
    %1082 = vmatprep.subr.bf16.mxu0 0
    %1083 = vmatpush1.bf16.xpose.msra.mxu0 0
    %1084 = vmatprep.subr.bf16.mxu0 0
    %1085 = vmatpush1.bf16.xpose.msra.mxu0 0
    %1086 = vmatprep.subr.bf16.mxu0 0
    %1087 = vmatpush1.bf16.xpose.msra.mxu0 0
    %1088 = vmatprep.subr.bf16.mxu0 0
    %1089 = vmatpush1.bf16.xpose.msra.mxu0 0
    %1090 = vmatprep.mubr.bf16.mxu0 0
    %1091 = vmatmul.mubr.bf16.gmra.mrb[0].mxu0 %v1053
    %v1092 = vpop.f32.mrb[0].mxu0
    %v1093 = vadd.f32 0.0, %v1092
    %v1094 = vpop.f32.mrb[0].mxu0
    %v1095 = vpop.f32.mrb[0].mxu0
    %v1096 = vpop.f32.mrb[0].mxu0
    %1097 = vdwg.mxu0
    %v1099 = vsel %vm56, %v1051, 0
    %1101 = vmatprep.subr.bf16.mxu0 0
    %1102 = vmatpush1.bf16.xpose.msra.mxu0 %v1099
    %1103 = vmatprep.subr.bf16.mxu0 0
    %1104 = vmatpush1.bf16.xpose.msra.mxu0 0
    %1105 = vmatprep.subr.bf16.mxu0 0
    %1106 = vmatpush1.bf16.xpose.msra.mxu0 0
    %1107 = vmatprep.subr.bf16.mxu0 0
    %1108 = vmatpush1.bf16.xpose.msra.mxu0 0
    %1109 = vmatprep.subr.bf16.mxu0 0
    %1110 = vmatpush1.bf16.xpose.msra.mxu0 0
    %1111 = vmatprep.subr.bf16.mxu0 0
    %1112 = vmatpush1.bf16.xpose.msra.mxu0 0
    %1113 = vmatprep.subr.bf16.mxu0 0
    %1114 = vmatpush1.bf16.xpose.msra.mxu0 0
    %1115 = vmatprep.subr.bf16.mxu0 0
    %1116 = vmatpush1.bf16.xpose.msra.mxu0 0
    %1117 = vmatprep.subr.bf16.mxu0 0
    %1118 = vmatpush1.bf16.xpose.msra.mxu0 0
    %1119 = vmatprep.subr.bf16.mxu0 0
    %1120 = vmatpush1.bf16.xpose.msra.mxu0 0
    %1121 = vmatprep.subr.bf16.mxu0 0
    %1122 = vmatpush1.bf16.xpose.msra.mxu0 0
    %1123 = vmatprep.subr.bf16.mxu0 0
    %1124 = vmatpush1.bf16.xpose.msra.mxu0 0
    %1125 = vmatprep.subr.bf16.mxu0 0
    %1126 = vmatpush1.bf16.xpose.msra.mxu0 0
    %1127 = vmatprep.subr.bf16.mxu0 0
    %1128 = vmatpush1.bf16.xpose.msra.mxu0 0
    %1129 = vmatprep.subr.bf16.mxu0 0
    %1130 = vmatpush1.bf16.xpose.msra.mxu0 0
    %1131 = vmatprep.subr.bf16.mxu0 0
    %1132 = vmatpush1.bf16.xpose.msra.mxu0 0
    %1133 = vmatprep.mubr.bf16.mxu0 0
    %1134 = vmatmul.mubr.bf16.gmra.mrb[0].mxu0 %v1053
    %v1135 = vpop.f32.mrb[0].mxu0
    %v1136 = vadd.f32 0.0, %v1135
    %v1137 = vpop.f32.mrb[0].mxu0
    %v1138 = vpop.f32.mrb[0].mxu0
    %v1139 = vpop.f32.mrb[0].mxu0
    %1140 = vdwg.mxu0
    %v1141 = vmul.f32 %v1093, 0.17677669
    %v1142 = vmul.f32 %v1136, 0.17677669
    %v1143 = vsel %vm213, %v1141, -1e+09
    %v1144 = vsel %vm214, %v1142, -1e+09
    %vm1145 = vcmask 60416
    %v1146 = vsel %vm1145, %v1143, -inf
    %1147 = vmax.xlane.f32.xlu0 %v1146
    %v1148 = vpop.xlane.xlu0 %1147
    %v1149 = vsel %vm1145, %v1144, -inf
    %1150 = vmax.xlane.f32.xlu0 %v1149
    %v1151 = vpop.xlane.xlu0 %1150
    %v1152 = vsub.f32 %v1143, %v1148
    %v1153 = vsub.f32 %v1144, %v1151
    %v1154 = vmul.f32 %v1152, 1.442695
    %v1155 = vpow.pop %v1154
    %v1156 = vmul.f32 %v1153, 1.442695
    %v1157 = vpow.pop %v1156
    %v1158 = vsel %vm1145, %v1155, 0.0
    %1159 = vadd.xlane.f32.xlu0 %v1158
    %v1160 = vpop.xlane.xlu0 %1159
    %v1161 = vsel %vm1145, %v1157, 0.0
    %1162 = vadd.xlane.f32.xlu0 %v1161
    %v1163 = vpop.xlane.xlu0 %1162
    %v1164 = vrcp.pop %v1160
    %v1165 = vrcp.pop %v1163
    %v1166 = vmul.f32 %v1155, %v1164
    %v1167 = vmul.f32 %v1157, %v1165
    %v1168 = vpack.c.bf16 %v1166, %v1166
    %v1169 = vpack.c.bf16 %v1167, %v1167
    %1171 = vrot.lane.b32.xlu0 %v1050, 96
    %v1172 = vpop.permute.xlu0 %1171
    %v1174 = vsel %vm217, %v1168, 0
    %v1177 = vsel %vm247, %v1172, 0
    %1179 = vmatprep.subr.bf16.mxu0 0
    %1180 = vmatpush1.bf16.msra.mxu0 %v1177
    %1181 = vmatprep.subr.bf16.mxu0 0
    %1182 = vmatpush1.bf16.msra.mxu0 0
    %1183 = vmatprep.subr.bf16.mxu0 0
    %1184 = vmatpush1.bf16.msra.mxu0 0
    %1185 = vmatprep.subr.bf16.mxu0 0
    %1186 = vmatpush1.bf16.msra.mxu0 0
    %1187 = vmatprep.subr.bf16.mxu0 0
    %1188 = vmatpush1.bf16.msra.mxu0 0
    %1189 = vmatprep.subr.bf16.mxu0 0
    %1190 = vmatpush1.bf16.msra.mxu0 0
    %1191 = vmatprep.subr.bf16.mxu0 0
    %1192 = vmatpush1.bf16.msra.mxu0 0
    %1193 = vmatprep.subr.bf16.mxu0 0
    %1194 = vmatpush1.bf16.msra.mxu0 0
    %1195 = vmatprep.subr.bf16.mxu0 0
    %1196 = vmatpush1.bf16.msra.mxu0 0
    %1197 = vmatprep.subr.bf16.mxu0 0
    %1198 = vmatpush1.bf16.msra.mxu0 0
    %1199 = vmatprep.subr.bf16.mxu0 0
    %1200 = vmatpush1.bf16.msra.mxu0 0
    %1201 = vmatprep.subr.bf16.mxu0 0
    %1202 = vmatpush1.bf16.msra.mxu0 0
    %1203 = vmatprep.subr.bf16.mxu0 0
    %1204 = vmatpush1.bf16.msra.mxu0 0
    %1205 = vmatprep.subr.bf16.mxu0 0
    %1206 = vmatpush1.bf16.msra.mxu0 0
    %1207 = vmatprep.subr.bf16.mxu0 0
    %1208 = vmatpush1.bf16.msra.mxu0 0
    %1209 = vmatprep.subr.bf16.mxu0 0
    %1210 = vmatpush1.bf16.msra.mxu0 0
    %1211 = vmatprep.mubr.bf16.mxu0 0
    %1212 = vmatmul.mubr.bf16.gmra.mrb[0].mxu0 %v1174
    %v1213 = vpop.f32.mrb[0].mxu0
    %v1214 = vadd.f32 0.0, %v1213
    %v1215 = vpop.f32.mrb[0].mxu0
    %v1216 = vpop.f32.mrb[0].mxu0
    %v1217 = vpop.f32.mrb[0].mxu0
    %1218 = vdwg.mxu0
    %1220 = vrot.lane.b32.xlu0 %v1051, 96
    %v1221 = vpop.permute.xlu0 %1220
    %v1223 = vsel %vm217, %v1169, 0
    %v1226 = vsel %vm247, %v1221, 0
    %1228 = vmatprep.subr.bf16.mxu0 0
    %1229 = vmatpush1.bf16.msra.mxu0 %v1226
    %1230 = vmatprep.subr.bf16.mxu0 0
    %1231 = vmatpush1.bf16.msra.mxu0 0
    %1232 = vmatprep.subr.bf16.mxu0 0
    %1233 = vmatpush1.bf16.msra.mxu0 0
    %1234 = vmatprep.subr.bf16.mxu0 0
    %1235 = vmatpush1.bf16.msra.mxu0 0
    %1236 = vmatprep.subr.bf16.mxu0 0
    %1237 = vmatpush1.bf16.msra.mxu0 0
    %1238 = vmatprep.subr.bf16.mxu0 0
    %1239 = vmatpush1.bf16.msra.mxu0 0
    %1240 = vmatprep.subr.bf16.mxu0 0
    %1241 = vmatpush1.bf16.msra.mxu0 0
    %1242 = vmatprep.subr.bf16.mxu0 0
    %1243 = vmatpush1.bf16.msra.mxu0 0
    %1244 = vmatprep.subr.bf16.mxu0 0
    %1245 = vmatpush1.bf16.msra.mxu0 0
    %1246 = vmatprep.subr.bf16.mxu0 0
    %1247 = vmatpush1.bf16.msra.mxu0 0
    %1248 = vmatprep.subr.bf16.mxu0 0
    %1249 = vmatpush1.bf16.msra.mxu0 0
    %1250 = vmatprep.subr.bf16.mxu0 0
    %1251 = vmatpush1.bf16.msra.mxu0 0
    %1252 = vmatprep.subr.bf16.mxu0 0
    %1253 = vmatpush1.bf16.msra.mxu0 0
    %1254 = vmatprep.subr.bf16.mxu0 0
    %1255 = vmatpush1.bf16.msra.mxu0 0
    %1256 = vmatprep.subr.bf16.mxu0 0
    %1257 = vmatpush1.bf16.msra.mxu0 0
    %1258 = vmatprep.subr.bf16.mxu0 0
    %1259 = vmatpush1.bf16.msra.mxu0 0
    %1260 = vmatprep.mubr.bf16.mxu0 0
    %1261 = vmatmul.mubr.bf16.gmra.mrb[0].mxu0 %v1223
    %v1262 = vpop.f32.mrb[0].mxu0
    %v1263 = vadd.f32 0.0, %v1262
    %v1264 = vpop.f32.mrb[0].mxu0
    %v1265 = vpop.f32.mrb[0].mxu0
    %v1266 = vpop.f32.mrb[0].mxu0
    %1267 = vdwg.mxu0
    %v1270 = vcombine.low %v1214, %v1263
    %v1272 = vpack.c.bf16 %v1270, %v1270
    %v1273 = vld [vmem:[%s4 + $0x18] sm:$0xf]
    %v1274 = vld [vmem:[%s4 + $0x48] sm:$0xf]
    %v1275 = vld [vmem:[%s4 + $0x78] sm:$0xf]
    %v1276 = vld [vmem:[%s4 + $0xa8] sm:$0xf]
    %v1281 = vunpack.c.l.b16 %v1273
    %v1282 = vunpack.c.l.b16 %v1274
    %v1283 = vunpack.c.l.b16 %v1275
    %v1284 = vunpack.c.l.b16 %v1276
    %v1285 = vpack.c.b16 %v1282, %v1281
    %v1286 = vpack.c.b16 %v1284, %v1283
    %v1290 = vsel %vm56, %v1272, 0
    %1292 = vmatprep.subr.bf16.mxu0 0
    %1293 = vmatpush1.bf16.msra.mxu0 %v1285
    %1294 = vmatprep.subr.bf16.mxu0 0
    %1295 = vmatpush1.bf16.msra.mxu0 %v1286
    %1296 = vmatprep.subr.bf16.mxu0 0
    %1297 = vmatpush1.bf16.msra.mxu0 0
    %1298 = vmatprep.subr.bf16.mxu0 0
    %1299 = vmatpush1.bf16.msra.mxu0 0
    %1300 = vmatprep.subr.bf16.mxu0 0
    %1301 = vmatpush1.bf16.msra.mxu0 0
    %1302 = vmatprep.subr.bf16.mxu0 0
    %1303 = vmatpush1.bf16.msra.mxu0 0
    %1304 = vmatprep.subr.bf16.mxu0 0
    %1305 = vmatpush1.bf16.msra.mxu0 0
    %1306 = vmatprep.subr.bf16.mxu0 0
    %1307 = vmatpush1.bf16.msra.mxu0 0
    %1308 = vmatprep.subr.bf16.mxu0 0
    %1309 = vmatpush1.bf16.msra.mxu0 0
    %1310 = vmatprep.subr.bf16.mxu0 0
    %1311 = vmatpush1.bf16.msra.mxu0 0
    %1312 = vmatprep.subr.bf16.mxu0 0
    %1313 = vmatpush1.bf16.msra.mxu0 0
    %1314 = vmatprep.subr.bf16.mxu0 0
    %1315 = vmatpush1.bf16.msra.mxu0 0
    %1316 = vmatprep.subr.bf16.mxu0 0
    %1317 = vmatpush1.bf16.msra.mxu0 0
    %1318 = vmatprep.subr.bf16.mxu0 0
    %1319 = vmatpush1.bf16.msra.mxu0 0
    %1320 = vmatprep.subr.bf16.mxu0 0
    %1321 = vmatpush1.bf16.msra.mxu0 0
    %1322 = vmatprep.subr.bf16.mxu0 0
    %1323 = vmatpush1.bf16.msra.mxu0 0
    %1324 = vmatprep.mubr.bf16.mxu0 0
    %1325 = vmatmul.mubr.bf16.gmra.mrb[0].mxu0 %v1290
    %v1326 = vpop.f32.mrb[0].mxu0
    %v1327 = vadd.f32 0.0, %v1326
    %v1328 = vpop.f32.mrb[0].mxu0
    %v1329 = vpop.f32.mrb[0].mxu0
    %v1330 = vpop.f32.mrb[0].mxu0
    %1331 = vdwg.mxu0
    %v1333 = vcombine.high %v1327, %v1327
    %v1335 = vadd.f32 %v917, %v1327
    %v1336 = vadd.f32 %v917, %v1333
    %v1337 = vld [vmem:[%s7 + $0xa] sm:$0x1]
    %v1338 = vld [vmem:[%s7 + $0xb] sm:$0x1]
    %v1341 = vcombine.low %v1335, %v1336
    %v1343 = vsel %vm56, %v1341, 0.0
    %1344 = vadd.xlane.f32.xlu0 %v1343
    %v1345 = vpop.xlane.xlu0 %1344
    %v1346 = vmul.f32 %v1345, %v410
    %v1349 = vunpack.c.l.s4 839922192
    %v1350 = vunpack.c.0.s8 %v1349
    %v1351 = vlaneseq
    %v1352 = vshrl.u32 %v1351, 7
    %v1353 = vsub.s32 %v1350, %v1352
    %v1354 = vrot.slane %v1346, %v1353
    %v1356 = vunpack.c.l.s4 1985246804
    %v1357 = vunpack.c.0.s8 %v1356
    %v1358 = vlaneseq
    %v1359 = vshrl.u32 %v1358, 7
    %v1360 = vsub.s32 %v1357, %v1359
    %v1361 = vrot.slane %v1346, %v1360
    %v1364 = vsub.f32 %v1335, %v1354
    %v1365 = vsub.f32 %v1336, %v1361
    %v1366 = vmul.f32 %v1364, %v1364
    %v1367 = vmul.f32 %v1365, %v1365
    %v1370 = vcombine.low %v1366, %v1367
    %v1372 = vsel %vm56, %v1370, 0.0
    %1373 = vadd.xlane.f32.xlu0 %v1372
    %v1374 = vpop.xlane.xlu0 %1373
    %v1375 = vmul.f32 %v1374, %v410
    %v1376 = vadd.f32 %v1375, 1e-12
    %v1377 = vrsqrt.pop %v1376
    %v1380 = vunpack.c.l.s4 839922192
    %v1381 = vunpack.c.0.s8 %v1380
    %v1382 = vlaneseq
    %v1383 = vshrl.u32 %v1382, 7
    %v1384 = vsub.s32 %v1381, %v1383
    %v1385 = vrot.slane %v1377, %v1384
    %v1387 = vunpack.c.l.s4 1985246804
    %v1388 = vunpack.c.0.s8 %v1387
    %v1389 = vlaneseq
    %v1390 = vshrl.u32 %v1389, 7
    %v1391 = vsub.s32 %v1388, %v1390
    %v1392 = vrot.slane %v1377, %v1391
    %v1395 = vmul.f32 %v1364, %v1385
    %v1396 = vmul.f32 %v1365, %v1392
    %v1397 = vlaneseq
    %v1398 = vshrl.u32 %v1397, 7
    %v1399 = vsub.s32 0, %v1398
    %v1400 = vrot.slane %v1337, %v1399
    %v1402 = vcombine.high %v1400, %v1400
    %v1404 = vmul.f32 %v1395, %v1400
    %v1405 = vmul.f32 %v1396, %v1402
    %v1406 = vlaneseq
    %v1407 = vshrl.u32 %v1406, 7
    %v1408 = vsub.s32 0, %v1407
    %v1409 = vrot.slane %v1338, %v1408
    %v1411 = vcombine.high %v1409, %v1409
    %v1413 = vadd.f32 %v1404, %v1409
    %v1414 = vadd.f32 %v1405, %v1411
    %v1417 = vcombine.low %v1413, %v1414
    %v1419 = vpack.c.bf16 %v1417, %v1417
    %v1420 = vld [vmem:[%s4 + $0x1c] sm:$0xf]
    %v1421 = vld [vmem:[%s4 + $0x4c] sm:$0xf]
    %v1422 = vld [vmem:[%s4 + $0x7c] sm:$0xf]
    %v1423 = vld [vmem:[%s4 + $0xac] sm:$0xf]
    %v1428 = vunpack.c.l.b16 %v1420
    %v1429 = vunpack.c.l.b16 %v1421
    %v1430 = vunpack.c.l.b16 %v1422
    %v1431 = vunpack.c.l.b16 %v1423
    %v1432 = vpack.c.b16 %v1429, %v1428
    %v1433 = vpack.c.b16 %v1431, %v1430
    %v1437 = vsel %vm56, %v1419, 0
    %1439 = vmatprep.subr.bf16.mxu0 0
    %1440 = vmatpush1.bf16.msra.mxu0 %v1432
    %1441 = vmatprep.subr.bf16.mxu0 0
    %1442 = vmatpush1.bf16.msra.mxu0 %v1433
    %1443 = vmatprep.subr.bf16.mxu0 0
    %1444 = vmatpush1.bf16.msra.mxu0 0
    %1445 = vmatprep.subr.bf16.mxu0 0
    %1446 = vmatpush1.bf16.msra.mxu0 0
    %1447 = vmatprep.subr.bf16.mxu0 0
    %1448 = vmatpush1.bf16.msra.mxu0 0
    %1449 = vmatprep.subr.bf16.mxu0 0
    %1450 = vmatpush1.bf16.msra.mxu0 0
    %1451 = vmatprep.subr.bf16.mxu0 0
    %1452 = vmatpush1.bf16.msra.mxu0 0
    %1453 = vmatprep.subr.bf16.mxu0 0
    %1454 = vmatpush1.bf16.msra.mxu0 0
    %1455 = vmatprep.subr.bf16.mxu0 0
    %1456 = vmatpush1.bf16.msra.mxu0 0
    %1457 = vmatprep.subr.bf16.mxu0 0
    %1458 = vmatpush1.bf16.msra.mxu0 0
    %1459 = vmatprep.subr.bf16.mxu0 0
    %1460 = vmatpush1.bf16.msra.mxu0 0
    %1461 = vmatprep.subr.bf16.mxu0 0
    %1462 = vmatpush1.bf16.msra.mxu0 0
    %1463 = vmatprep.subr.bf16.mxu0 0
    %1464 = vmatpush1.bf16.msra.mxu0 0
    %1465 = vmatprep.subr.bf16.mxu0 0
    %1466 = vmatpush1.bf16.msra.mxu0 0
    %1467 = vmatprep.subr.bf16.mxu0 0
    %1468 = vmatpush1.bf16.msra.mxu0 0
    %1469 = vmatprep.subr.bf16.mxu0 0
    %1470 = vmatpush1.bf16.msra.mxu0 0
    %1471 = vmatprep.mubr.bf16.mxu0 0
    %1472 = vmatmul.mubr.bf16.gmra.mrb[0].mxu0 %v1437
    %v1473 = vpop.f32.mrb[0].mxu0
    %v1474 = vadd.f32 0.0, %v1473
    %v1475 = vpop.f32.mrb[0].mxu0
    %v1476 = vpop.f32.mrb[0].mxu0
    %v1477 = vpop.f32.mrb[0].mxu0
    %1478 = vdwg.mxu0
    %v1479 = vld [vmem:[%s7 + $0x2] sm:$0x1]
    %v1480 = vlaneseq
    %v1481 = vshrl.u32 %v1480, 7
    %v1482 = vsub.s32 0, %v1481
    %v1483 = vrot.slane %v1479, %v1482
    %v1484 = vadd.f32 %v1474, %v1483
    %v1485 = vmul.f32 %v1484, %v1484
    %v1486 = vmul.f32 %v1484, %v1485
    %v1487 = vmul.f32 %v1486, 0.044715
    %v1488 = vadd.f32 %v1484, %v1487
    %v1489 = vmul.f32 %v1488, 0.7978846
    %v1490 = vtanh.pop %v1489
    %v1491 = vadd.f32 %v1490, 1.0
    %v1492 = vmul.f32 %v1491, 0.5
    %v1493 = vmul.f32 %v1484, %v1492
    %v1494 = vpack.c.bf16 %v1493, %v1493
    %v1495 = vld [vmem:[%s5 + $0x4] sm:$0xf]
    %v1496 = vld [vmem:[%s5 + $0xc] sm:$0xf]
    %v1497 = vld [vmem:[%s5 + $0x14] sm:$0xf]
    %v1498 = vld [vmem:[%s5 + $0x1c] sm:$0xf]
    %v1499 = vld [vmem:[%s5 + $0x24] sm:$0xf]
    %v1500 = vld [vmem:[%s5 + $0x2c] sm:$0xf]
    %v1501 = vld [vmem:[%s5 + $0x34] sm:$0xf]
    %v1502 = vld [vmem:[%s5 + $0x3c] sm:$0xf]
    %v1511 = vunpack.c.l.b16 %v1495
    %v1512 = vunpack.c.l.b16 %v1496
    %v1513 = vunpack.c.l.b16 %v1497
    %v1514 = vunpack.c.l.b16 %v1498
    %v1515 = vunpack.c.l.b16 %v1499
    %v1516 = vunpack.c.l.b16 %v1500
    %v1517 = vunpack.c.l.b16 %v1501
    %v1518 = vunpack.c.l.b16 %v1502
    %v1519 = vpack.c.b16 %v1512, %v1511
    %v1520 = vpack.c.b16 %v1514, %v1513
    %v1521 = vpack.c.b16 %v1516, %v1515
    %v1522 = vpack.c.b16 %v1518, %v1517
    %v1528 = vsel %vm562, %v1494, 0
    %1530 = vmatprep.subr.bf16.mxu0 0
    %1531 = vmatpush1.bf16.msra.mxu0 %v1519
    %1532 = vmatprep.subr.bf16.mxu0 0
    %1533 = vmatpush1.bf16.msra.mxu0 %v1520
    %1534 = vmatprep.subr.bf16.mxu0 0
    %1535 = vmatpush1.bf16.msra.mxu0 %v1521
    %1536 = vmatprep.subr.bf16.mxu0 0
    %1537 = vmatpush1.bf16.msra.mxu0 %v1522
    %1538 = vmatprep.subr.bf16.mxu0 0
    %1539 = vmatpush1.bf16.msra.mxu0 0
    %1540 = vmatprep.subr.bf16.mxu0 0
    %1541 = vmatpush1.bf16.msra.mxu0 0
    %1542 = vmatprep.subr.bf16.mxu0 0
    %1543 = vmatpush1.bf16.msra.mxu0 0
    %1544 = vmatprep.subr.bf16.mxu0 0
    %1545 = vmatpush1.bf16.msra.mxu0 0
    %1546 = vmatprep.subr.bf16.mxu0 0
    %1547 = vmatpush1.bf16.msra.mxu0 0
    %1548 = vmatprep.subr.bf16.mxu0 0
    %1549 = vmatpush1.bf16.msra.mxu0 0
    %1550 = vmatprep.subr.bf16.mxu0 0
    %1551 = vmatpush1.bf16.msra.mxu0 0
    %1552 = vmatprep.subr.bf16.mxu0 0
    %1553 = vmatpush1.bf16.msra.mxu0 0
    %1554 = vmatprep.subr.bf16.mxu0 0
    %1555 = vmatpush1.bf16.msra.mxu0 0
    %1556 = vmatprep.subr.bf16.mxu0 0
    %1557 = vmatpush1.bf16.msra.mxu0 0
    %1558 = vmatprep.subr.bf16.mxu0 0
    %1559 = vmatpush1.bf16.msra.mxu0 0
    %1560 = vmatprep.subr.bf16.mxu0 0
    %1561 = vmatpush1.bf16.msra.mxu0 0
    %1562 = vmatprep.mubr.bf16.mxu0 0
    %1563 = vmatmul.mubr.bf16.gmra.mrb[0].mxu0 %v1528
    %v1564 = vpop.f32.mrb[0].mxu0
    %v1565 = vadd.f32 0.0, %v1564
    %v1566 = vpop.f32.mrb[0].mxu0
    %v1567 = vpop.f32.mrb[0].mxu0
    %v1568 = vpop.f32.mrb[0].mxu0
    %1569 = vdwg.mxu0
    %v1570 = vld [vmem:[%s7 + $0x3] sm:$0x1]
    %v1571 = vlaneseq
    %v1572 = vshrl.u32 %v1571, 7
    %v1573 = vsub.s32 0, %v1572
    %v1574 = vrot.slane %v1570, %v1573
    %v1575 = vadd.f32 %v1565, %v1574
    %v1577 = vcombine.high %v1575, %v1575
    %v1579 = vadd.f32 %v1413, %v1575
    %v1580 = vadd.f32 %v1414, %v1577
    %v1581 = vld [vmem:[%s7 + $0xc] sm:$0x1]
    %v1582 = vld [vmem:[%s7 + $0xd] sm:$0x1]
    %v1585 = vcombine.low %v1579, %v1580
    %v1587 = vsel %vm56, %v1585, 0.0
    %1588 = vadd.xlane.f32.xlu0 %v1587
    %v1589 = vpop.xlane.xlu0 %1588
    %v1590 = vmul.f32 %v1589, %v410
    %v1593 = vunpack.c.l.s4 839922192
    %v1594 = vunpack.c.0.s8 %v1593
    %v1595 = vlaneseq
    %v1596 = vshrl.u32 %v1595, 7
    %v1597 = vsub.s32 %v1594, %v1596
    %v1598 = vrot.slane %v1590, %v1597
    %v1600 = vunpack.c.l.s4 1985246804
    %v1601 = vunpack.c.0.s8 %v1600
    %v1602 = vlaneseq
    %v1603 = vshrl.u32 %v1602, 7
    %v1604 = vsub.s32 %v1601, %v1603
    %v1605 = vrot.slane %v1590, %v1604
    %v1608 = vsub.f32 %v1579, %v1598
    %v1609 = vsub.f32 %v1580, %v1605
    %v1610 = vmul.f32 %v1608, %v1608
    %v1611 = vmul.f32 %v1609, %v1609
    %v1614 = vcombine.low %v1610, %v1611
    %v1616 = vsel %vm56, %v1614, 0.0
    %1617 = vadd.xlane.f32.xlu0 %v1616
    %v1618 = vpop.xlane.xlu0 %1617
    %v1619 = vmul.f32 %v1618, %v410
    %v1620 = vadd.f32 %v1619, 1e-12
    %v1621 = vrsqrt.pop %v1620
    %v1624 = vunpack.c.l.s4 839922192
    %v1625 = vunpack.c.0.s8 %v1624
    %v1626 = vlaneseq
    %v1627 = vshrl.u32 %v1626, 7
    %v1628 = vsub.s32 %v1625, %v1627
    %v1629 = vrot.slane %v1621, %v1628
    %v1631 = vunpack.c.l.s4 1985246804
    %v1632 = vunpack.c.0.s8 %v1631
    %v1633 = vlaneseq
    %v1634 = vshrl.u32 %v1633, 7
    %v1635 = vsub.s32 %v1632, %v1634
    %v1636 = vrot.slane %v1621, %v1635
    %v1639 = vmul.f32 %v1608, %v1629
    %v1640 = vmul.f32 %v1609, %v1636
    %v1641 = vlaneseq
    %v1642 = vshrl.u32 %v1641, 7
    %v1643 = vsub.s32 0, %v1642
    %v1644 = vrot.slane %v1581, %v1643
    %v1646 = vcombine.high %v1644, %v1644
    %v1648 = vmul.f32 %v1639, %v1644
    %v1649 = vmul.f32 %v1640, %v1646
    %v1650 = vlaneseq
    %v1651 = vshrl.u32 %v1650, 7
    %v1652 = vsub.s32 0, %v1651
    %v1653 = vrot.slane %v1582, %v1652
    %v1655 = vcombine.high %v1653, %v1653
    %v1657 = vadd.f32 %v1648, %v1653
    %v1658 = vadd.f32 %v1649, %v1655
    %v1661 = vcombine.low %v1657, %v1658
    %v1663 = vpack.c.bf16 %v1661, %v1661
    %v1664 = vld [vmem:[%s4 + $0x28] sm:$0xff]
    %v1665 = vld [vmem:[%s4 + $0x58] sm:$0xff]
    %v1666 = vld [vmem:[%s4 + $0x88] sm:$0xff]
    %v1667 = vld [vmem:[%s4 + $0xb8] sm:$0xff]
    %v1672 = vunpack.c.l.b16 %v1664
    %v1673 = vunpack.c.h.b16 %v1664
    %v1674 = vunpack.c.l.b16 %v1665
    %v1675 = vunpack.c.h.b16 %v1665
    %v1676 = vunpack.c.l.b16 %v1666
    %v1677 = vunpack.c.h.b16 %v1666
    %v1678 = vunpack.c.l.b16 %v1667
    %v1679 = vunpack.c.h.b16 %v1667
    %v1680 = vpack.c.b16 %v1674, %v1672
    %v1681 = vpack.c.b16 %v1675, %v1673
    %v1682 = vpack.c.b16 %v1678, %v1676
    %v1683 = vpack.c.b16 %v1679, %v1677
    %v1689 = vsel %vm56, %v1663, 0
    %1691 = vmatprep.subr.bf16.mxu0 %v1681
    %1692 = vmatpush1.bf16.msra.mxu0 %v1680
    %1693 = vmatprep.subr.bf16.mxu0 %v1683
    %1694 = vmatpush1.bf16.msra.mxu0 %v1682
    %1695 = vmatprep.subr.bf16.mxu0 0
    %1696 = vmatpush1.bf16.msra.mxu0 0
    %1697 = vmatprep.subr.bf16.mxu0 0
    %1698 = vmatpush1.bf16.msra.mxu0 0
    %1699 = vmatprep.subr.bf16.mxu0 0
    %1700 = vmatpush1.bf16.msra.mxu0 0
    %1701 = vmatprep.subr.bf16.mxu0 0
    %1702 = vmatpush1.bf16.msra.mxu0 0
    %1703 = vmatprep.subr.bf16.mxu0 0
    %1704 = vmatpush1.bf16.msra.mxu0 0
    %1705 = vmatprep.subr.bf16.mxu0 0
    %1706 = vmatpush1.bf16.msra.mxu0 0
    %1707 = vmatprep.subr.bf16.mxu0 0
    %1708 = vmatpush1.bf16.msra.mxu0 0
    %1709 = vmatprep.subr.bf16.mxu0 0
    %1710 = vmatpush1.bf16.msra.mxu0 0
    %1711 = vmatprep.subr.bf16.mxu0 0
    %1712 = vmatpush1.bf16.msra.mxu0 0
    %1713 = vmatprep.subr.bf16.mxu0 0
    %1714 = vmatpush1.bf16.msra.mxu0 0
    %1715 = vmatprep.subr.bf16.mxu0 0
    %1716 = vmatpush1.bf16.msra.mxu0 0
    %1717 = vmatprep.subr.bf16.mxu0 0
    %1718 = vmatpush1.bf16.msra.mxu0 0
    %1719 = vmatprep.subr.bf16.mxu0 0
    %1720 = vmatpush1.bf16.msra.mxu0 0
    %1721 = vmatprep.subr.bf16.mxu0 0
    %1722 = vmatpush1.bf16.msra.mxu0 0
    %1723 = vmatprep.mubr.bf16.mxu0 0
    %1724 = vmatmul.mubr.bf16.gmra.mrb[0].mxu0 %v1689
    %v1725 = vpop.f32.mrb[0].mxu0
    %v1726 = vadd.f32 0.0, %v1725
    %v1727 = vpop.f32.mrb[0].mxu0
    %v1728 = vadd.f32 0.0, %v1727
    %v1729 = vpop.f32.mrb[0].mxu0
    %v1730 = vpop.f32.mrb[0].mxu0
    %1731 = vdwg.mxu0
    %v1732 = vld [vmem:[%s7 + $0xe] sm:$0x1]
    %v1733 = vlaneseq
    %v1734 = vshrl.u32 %v1733, 7
    %v1735 = vsub.s32 0, %v1734
    %v1736 = vrot.slane %v1732, %v1735
    %v1737 = vadd.f32 %v1728, %v1736
    %v1739 = vcombine.high %v1737, %v1737
    %1741 = vst [vmem:[#allocation2] sm:$0xf] %v1737
    %1742 = vst [vmem:[#allocation2 + $0x4] sm:$0xf] %v1739
    %v1743 = vld [vmem:[%s7 + $0xf] sm:$0x1]
    %v1745 = vcombine.high %v1726, %v1726
    %v1747 = vunpack.c.l.s4 1966171168
    %v1748 = vunpack.c.0.s8 %v1747
    %v1749 = vlaneseq
    %v1750 = vshrl.u32 %v1749, 7
    %v1751 = vsub.s32 %v1748, %v1750
    %v1752 = vrot.slane %v1726, %v1751
    %v1754 = vunpack.c.l.s4 1966171168
    %v1755 = vunpack.c.0.s8 %v1754
    %v1756 = vlaneseq
    %v1757 = vshrl.u32 %v1756, 7
    %v1758 = vsub.s32 %v1755, %v1757
    %v1759 = vrot.slane %v1745, %v1758
    %v1760 = vcombine.high %v1752, %v1752
    %v1761 = vcombine.high %v1759, %v1759
    %v1763 = vunpack.c.l.s4 1966171168
    %v1764 = vunpack.c.0.s8 %v1763
    %v1765 = vlaneseq
    %v1766 = vshrl.u32 %v1765, 7
    %v1767 = vsub.s32 %v1764, %v1766
    %v1768 = vrot.slane %v1752, %v1767
    %v1770 = vunpack.c.l.s4 1966171168
    %v1771 = vunpack.c.0.s8 %v1770
    %v1772 = vlaneseq
    %v1773 = vshrl.u32 %v1772, 7
    %v1774 = vsub.s32 %v1771, %v1773
    %v1775 = vrot.slane %v1759, %v1774
    %v1777 = vunpack.c.l.s4 1966171168
    %v1778 = vunpack.c.0.s8 %v1777
    %v1779 = vlaneseq
    %v1780 = vshrl.u32 %v1779, 7
    %v1781 = vsub.s32 %v1778, %v1780
    %v1782 = vrot.slane %v1760, %v1781
    %v1784 = vunpack.c.l.s4 1966171168
    %v1785 = vunpack.c.0.s8 %v1784
    %v1786 = vlaneseq
    %v1787 = vshrl.u32 %v1786, 7
    %v1788 = vsub.s32 %v1785, %v1787
    %v1789 = vrot.slane %v1761, %v1788
    %v1790 = vcombine.high %v1768, %v1768
    %v1791 = vcombine.high %v1775, %v1775
    %v1792 = vcombine.high %v1782, %v1782
    %v1793 = vcombine.high %v1789, %v1789
    %v1794 = vlaneseq
    %v1795 = vshrl.u32 %v1794, 7
    %v1796 = vsub.s32 0, %v1795
    %v1797 = vrot.slane %v1768, %v1796
    %v1798 = vlaneseq
    %v1799 = vshrl.u32 %v1798, 7
    %v1800 = vsub.s32 0, %v1799
    %v1801 = vrot.slane %v1782, %v1800
    %v1802 = vlaneseq
    %v1803 = vshrl.u32 %v1802, 7
    %v1804 = vsub.s32 0, %v1803
    %v1805 = vrot.slane %v1790, %v1804
    %v1806 = vlaneseq
    %v1807 = vshrl.u32 %v1806, 7
    %v1808 = vsub.s32 0, %v1807
    %v1809 = vrot.slane %v1792, %v1808
    %v1810 = vlaneseq
    %v1811 = vshrl.u32 %v1810, 7
    %v1812 = vsub.s32 0, %v1811
    %v1813 = vrot.slane %v1775, %v1812
    %v1814 = vlaneseq
    %v1815 = vshrl.u32 %v1814, 7
    %v1816 = vsub.s32 0, %v1815
    %v1817 = vrot.slane %v1789, %v1816
    %v1818 = vlaneseq
    %v1819 = vshrl.u32 %v1818, 7
    %v1820 = vsub.s32 0, %v1819
    %v1821 = vrot.slane %v1791, %v1820
    %v1822 = vlaneseq
    %v1823 = vshrl.u32 %v1822, 7
    %v1824 = vsub.s32 0, %v1823
    %v1825 = vrot.slane %v1793, %v1824
    %v1834 = vadd.f32 %v1797, %v1044
    %v1835 = vadd.f32 %v1801, %v1044
    %v1836 = vadd.f32 %v1805, %v1044
    %v1837 = vadd.f32 %v1809, %v1044
    %v1838 = vadd.f32 %v1813, %v1048
    %v1839 = vadd.f32 %v1817, %v1048
    %v1840 = vadd.f32 %v1821, %v1048
    %v1841 = vadd.f32 %v1825, %v1048
    %v1842 = vlaneseq
    %v1843 = vshrl.u32 %v1842, 7
    %v1844 = vsub.s32 0, %v1843
    %v1845 = vrot.slane %v1743, %v1844
    %v1846 = vadd.f32 %v1834, %v1845
    %v1847 = vadd.f32 %v1835, %v1845
    %v1848 = vadd.f32 %v1836, %v1845
    %v1849 = vadd.f32 %v1837, %v1845
    %v1850 = vadd.f32 %v1838, %v1845
    %v1851 = vadd.f32 %v1839, %v1845
    %v1852 = vadd.f32 %v1840, %v1845
    %v1853 = vadd.f32 %v1841, %v1845
    %v1854 = vtanh.pop %v1846
    %v1855 = vtanh.pop %v1847
    %v1856 = vtanh.pop %v1848
    %v1857 = vtanh.pop %v1849
    %v1858 = vtanh.pop %v1850
    %v1859 = vtanh.pop %v1851
    %v1860 = vtanh.pop %v1852
    %v1861 = vtanh.pop %v1853
    %v1862 = vpack.c.bf16 %v1855, %v1854
    %v1863 = vpack.c.bf16 %v1857, %v1856
    %v1864 = vpack.c.bf16 %v1859, %v1858
    %v1865 = vpack.c.bf16 %v1861, %v1860
    %v1866 = vld [vmem:[%s6] sm:$0xf]
    %v1867 = vld [vmem:[%s6 + $0x4] sm:$0xf]
    %v1868 = vld [vmem:[%s6 + $0x8] sm:$0xf]
    %v1869 = vld [vmem:[%s6 + $0xc] sm:$0xf]
    %v1870 = vld [vmem:[%s6 + $0x10] sm:$0xf]
    %v1871 = vld [vmem:[%s6 + $0x14] sm:$0xf]
    %v1872 = vld [vmem:[%s6 + $0x18] sm:$0xf]
    %v1873 = vld [vmem:[%s6 + $0x1c] sm:$0xf]
    %v1874 = vld [vmem:[%s6 + $0x20] sm:$0xf]
    %v1875 = vld [vmem:[%s6 + $0x24] sm:$0xf]
    %v1876 = vld [vmem:[%s6 + $0x28] sm:$0xf]
    %v1877 = vld [vmem:[%s6 + $0x2c] sm:$0xf]
    %v1878 = vld [vmem:[%s6 + $0x30] sm:$0xf]
    %v1879 = vld [vmem:[%s6 + $0x34] sm:$0xf]
    %v1880 = vld [vmem:[%s6 + $0x38] sm:$0xf]
    %v1881 = vld [vmem:[%s6 + $0x3c] sm:$0xf]
    %v1898 = vunpack.c.l.b16 %v1866
    %v1899 = vunpack.c.l.b16 %v1867
    %v1900 = vunpack.c.l.b16 %v1868
    %v1901 = vunpack.c.l.b16 %v1869
    %v1902 = vunpack.c.l.b16 %v1870
    %v1903 = vunpack.c.l.b16 %v1871
    %v1904 = vunpack.c.l.b16 %v1872
    %v1905 = vunpack.c.l.b16 %v1873
    %v1906 = vunpack.c.l.b16 %v1874
    %v1907 = vunpack.c.l.b16 %v1875
    %v1908 = vunpack.c.l.b16 %v1876
    %v1909 = vunpack.c.l.b16 %v1877
    %v1910 = vunpack.c.l.b16 %v1878
    %v1911 = vunpack.c.l.b16 %v1879
    %v1912 = vunpack.c.l.b16 %v1880
    %v1913 = vunpack.c.l.b16 %v1881
    %v1914 = vpack.c.b16 %v1899, %v1898
    %v1915 = vpack.c.b16 %v1901, %v1900
    %v1916 = vpack.c.b16 %v1903, %v1902
    %v1917 = vpack.c.b16 %v1905, %v1904
    %v1918 = vpack.c.b16 %v1907, %v1906
    %v1919 = vpack.c.b16 %v1909, %v1908
    %v1920 = vpack.c.b16 %v1911, %v1910
    %v1921 = vpack.c.b16 %v1913, %v1912
    %1930 = vmatprep.subr.bf16.mxu0 0
    %1931 = vmatpush1.bf16.msra.mxu0 %v1914
    %1932 = vmatprep.subr.bf16.mxu0 0
    %1933 = vmatpush1.bf16.msra.mxu0 %v1915
    %1934 = vmatprep.subr.bf16.mxu0 0
    %1935 = vmatpush1.bf16.msra.mxu0 %v1916
    %1936 = vmatprep.subr.bf16.mxu0 0
    %1937 = vmatpush1.bf16.msra.mxu0 %v1917
    %1938 = vmatprep.subr.bf16.mxu0 0
    %1939 = vmatpush1.bf16.msra.mxu0 %v1918
    %1940 = vmatprep.subr.bf16.mxu0 0
    %1941 = vmatpush1.bf16.msra.mxu0 %v1919
    %1942 = vmatprep.subr.bf16.mxu0 0
    %1943 = vmatpush1.bf16.msra.mxu0 %v1920
    %1944 = vmatprep.subr.bf16.mxu0 0
    %1945 = vmatpush1.bf16.msra.mxu0 %v1921
    %1946 = vmatprep.subr.bf16.mxu0 0
    %1947 = vmatpush1.bf16.msra.mxu0 0
    %1948 = vmatprep.subr.bf16.mxu0 0
    %1949 = vmatpush1.bf16.msra.mxu0 0
    %1950 = vmatprep.subr.bf16.mxu0 0
    %1951 = vmatpush1.bf16.msra.mxu0 0
    %1952 = vmatprep.subr.bf16.mxu0 0
    %1953 = vmatpush1.bf16.msra.mxu0 0
    %1954 = vmatprep.subr.bf16.mxu0 0
    %1955 = vmatpush1.bf16.msra.mxu0 0
    %1956 = vmatprep.subr.bf16.mxu0 0
    %1957 = vmatpush1.bf16.msra.mxu0 0
    %1958 = vmatprep.subr.bf16.mxu0 0
    %1959 = vmatpush1.bf16.msra.mxu0 0
    %1960 = vmatprep.subr.bf16.mxu0 0
    %1961 = vmatpush1.bf16.msra.mxu0 0
    %1962 = vmatprep.mubr.bf16.mxu0 0
    %1963 = vmatmul.mubr.bf16.gmra.mrb[0].mxu0 %v1862
    %v1964 = vpop.f32.mrb[0].mxu0
    %v1965 = vadd.f32 0.0, %v1964
    %v1966 = vpop.f32.mrb[0].mxu0
    %v1967 = vpop.f32.mrb[0].mxu0
    %v1968 = vadd.f32 0.0, %v1967
    %v1969 = vpop.f32.mrb[0].mxu0
    %1970 = vmatprep.mubr.bf16.mxu0 0
    %1971 = vmatmul.mubr.bf16.gmra.mrb[0].mxu0 %v1863
    %v1972 = vpop.f32.mrb[0].mxu0
    %v1973 = vadd.f32 0.0, %v1972
    %v1974 = vpop.f32.mrb[0].mxu0
    %v1975 = vpop.f32.mrb[0].mxu0
    %v1976 = vadd.f32 0.0, %v1975
    %v1977 = vpop.f32.mrb[0].mxu0
    %1978 = vmatprep.mubr.bf16.mxu0 0
    %1979 = vmatmul.mubr.bf16.gmra.mrb[0].mxu0 %v1864
    %v1980 = vpop.f32.mrb[0].mxu0
    %v1981 = vadd.f32 0.0, %v1980
    %v1982 = vpop.f32.mrb[0].mxu0
    %v1983 = vpop.f32.mrb[0].mxu0
    %v1984 = vadd.f32 0.0, %v1983
    %v1985 = vpop.f32.mrb[0].mxu0
    %1986 = vmatprep.mubr.bf16.mxu0 0
    %1987 = vmatmul.mubr.bf16.gmra.mrb[0].mxu0 %v1865
    %v1988 = vpop.f32.mrb[0].mxu0
    %v1989 = vadd.f32 0.0, %v1988
    %v1990 = vpop.f32.mrb[0].mxu0
    %v1991 = vpop.f32.mrb[0].mxu0
    %v1992 = vadd.f32 0.0, %v1991
    %v1993 = vpop.f32.mrb[0].mxu0
    %1994 = vdwg.mxu0
    %v1995 = vld [vmem:[%s2] sm:$0xff]
    %v1996 = vld [vmem:[%s2 + $0x8] sm:$0xff]
    %v1997 = vld [vmem:[%s2 + $0x10] sm:$0xff]
    %v1998 = vld [vmem:[%s2 + $0x18] sm:$0xff]
    %v1999 = vld [vmem:[%s2 + $0x20] sm:$0xff]
    %v2000 = vld [vmem:[%s2 + $0x28] sm:$0xff]
    %v2001 = vld [vmem:[%s2 + $0x30] sm:$0xff]
    %v2002 = vld [vmem:[%s2 + $0x38] sm:$0xff]
    %vm2003 = vcmp.gt.f32.partialorder %v1995, 0.0
    %vm2004 = vcmp.gt.f32.partialorder %v1996, 0.0
    %vm2005 = vcmp.gt.f32.partialorder %v1997, 0.0
    %vm2006 = vcmp.gt.f32.partialorder %v1998, 0.0
    %vm2007 = vcmp.gt.f32.partialorder %v1999, 0.0
    %vm2008 = vcmp.gt.f32.partialorder %v2000, 0.0
    %vm2009 = vcmp.gt.f32.partialorder %v2001, 0.0
    %vm2010 = vcmp.gt.f32.partialorder %v2002, 0.0
    %v2011 = vsel %vm2003, 1, 0
    %v2012 = vsel %vm2004, 1, 0
    %v2013 = vsel %vm2005, 1, 0
    %v2014 = vsel %vm2006, 1, 0
    %v2015 = vsel %vm2007, 1, 0
    %v2016 = vsel %vm2008, 1, 0
    %v2017 = vsel %vm2009, 1, 0
    %v2018 = vsel %vm2010, 1, 0
    %2019 = vset.pattern.permute.xlu0 0
    %2020 = vperm.xlu0 %2019, %v2011
    %v2021 = vpop.permute.xlu0 %2020
    %2022 = vset.pattern.permute.xlu0 0
    %2023 = vperm.xlu0 %2022, %v2012
    %v2024 = vpop.permute.xlu0 %2023
    %2025 = vset.pattern.permute.xlu0 0
    %2026 = vperm.xlu0 %2025, %v2013
    %v2027 = vpop.permute.xlu0 %2026
    %2028 = vset.pattern.permute.xlu0 0
    %2029 = vperm.xlu0 %2028, %v2014
    %v2030 = vpop.permute.xlu0 %2029
    %2031 = vset.pattern.permute.xlu0 0
    %2032 = vperm.xlu0 %2031, %v2015
    %v2033 = vpop.permute.xlu0 %2032
    %2034 = vset.pattern.permute.xlu0 0
    %2035 = vperm.xlu0 %2034, %v2016
    %v2036 = vpop.permute.xlu0 %2035
    %2037 = vset.pattern.permute.xlu0 0
    %2038 = vperm.xlu0 %2037, %v2017
    %v2039 = vpop.permute.xlu0 %2038
    %2040 = vset.pattern.permute.xlu0 0
    %2041 = vperm.xlu0 %2040, %v2018
    %v2042 = vpop.permute.xlu0 %2041
    %vm2043 = vcmp.eq.s32.totalorder %v2021, 1
    %vm2044 = vcmp.eq.s32.totalorder %v2024, 1
    %vm2045 = vcmp.eq.s32.totalorder %v2027, 1
    %vm2046 = vcmp.eq.s32.totalorder %v2030, 1
    %vm2047 = vcmp.eq.s32.totalorder %v2033, 1
    %vm2048 = vcmp.eq.s32.totalorder %v2036, 1
    %vm2049 = vcmp.eq.s32.totalorder %v2039, 1
    %vm2050 = vcmp.eq.s32.totalorder %v2042, 1
    %v2051 = vsel %vm2043, %v1965, -10000.0
    %v2052 = vsel %vm2044, %v1968, -10000.0
    %v2053 = vsel %vm2045, %v1973, -10000.0
    %v2054 = vsel %vm2046, %v1976, -10000.0
    %v2055 = vsel %vm2047, %v1981, -10000.0
    %v2056 = vsel %vm2048, %v1984, -10000.0
    %v2057 = vsel %vm2049, %v1989, -10000.0
    %v2058 = vsel %vm2050, %v1992, -10000.0
    %2059 = vst [vmem:[%s8] sm:$0xff] %v2051
    %2060 = vst [vmem:[%s8 + $0x8] sm:$0xff] %v2052
    %2061 = vst [vmem:[%s8 + $0x10] sm:$0xff] %v2053
    %2062 = vst [vmem:[%s8 + $0x18] sm:$0xff] %v2054
    %2063 = vst [vmem:[%s8 + $0x20] sm:$0xff] %v2055
    %2064 = vst [vmem:[%s8 + $0x28] sm:$0xff] %v2056
    %2065 = vst [vmem:[%s8 + $0x30] sm:$0xff] %v2057
    %2066 = vst [vmem:[%s8 + $0x38] sm:$0xff] %v2058
    // Predicated region
    $region34: #{smarte_forward.1} parent=1 // pred_check
      _
    $region35: #{smarte_forward.1} parent=1 // pred_check_branch
      %2068 = sbr.rel (0) target = $region37
    $region36: #{smarte_forward.1} parent=1 // pred_region
      _
    $region37: #{smarte_forward.1} parent=1 // pred_fallthru
      _
    // Predicated region
    $region38: #{smarte_forward.1} parent=1 // pred_check
      _
    $region39: #{smarte_forward.1} parent=1 // pred_check_branch
      %2070 = sbr.rel (0) target = $region41
    $region40: #{smarte_forward.1} parent=1 // pred_region
      %s2072 = ssub.s32 128, 128
      %2073 = vsyncadd [#allocation3], %s2072
      %s2074 = sshll.u32 [#allocation2], 4
      %s2075 = int_to_ptr.vmem [resolvable:$true] %s2074
      %2080 = dma.vmem_to_hbm [thread:$0]  %s2075, 128, %s9, [#allocation3], 64, 64, 4
    $region41: #{smarte_forward.1} parent=1 // pred_fallthru
      _
    // Predicated region
    $region42: #{smarte_forward.1} parent=1 // pred_check
      _
    $region43: #{smarte_forward.1} parent=1 // pred_check_branch
      %2082 = sbr.rel (0) target = $region45
    $region44: #{smarte_forward.1} parent=1 // pred_region
      _
    $region45: #{smarte_forward.1} parent=1 // pred_fallthru
      _
    // Predicated region
    $region46: #{smarte_forward.1} parent=1 // pred_check
      _
    $region47: #{smarte_forward.1} parent=1 // pred_check_branch
      %2084 = sbr.rel (0) target = $region49
    $region48: #{smarte_forward.1} parent=1 // pred_region
      %2085 = dma.done [#allocation3], 128
    $region49: #{smarte_forward.1} parent=1 // pred_fallthru
      _
    %2086 = vsyncpa [#allocation3], 1

</llo_original>
